<compile_context>
chip_gen: v7x
topology: tpu7x:2x2x1
jax: 0.10.0
libtpu: 0.0.40
codegen_flags: <defaults>
</compile_context>

<pallas_src>
import functools

import jax
import jax.numpy as jnp
from jax import lax
from jax.experimental import pallas as pl
from jax.experimental.pallas import tpu as pltpu


# ------------------------------ Pallas kernel ------------------------------ #
def _subsample4_kernel(xpat_ref, w1_ref, b1_ref, w2_ref, b2_ref, wl_ref, bl_ref,
                       o_ref, y1_ref, y2_ref, *, F1, F2, t2_tile, nt, odim, cdt):
    """Fused conv1+ReLU -> conv2+ReLU -> Linear for one (batch, time-tile) chunk.

    xpat_ref : (1, 2*nt, F1*9)   polyphase conv1 patches; row = pt*nt + tt,
                                 col = f1*9 + (3*i + j)
    w1_ref   : (9, odim)         conv1 weight, tap-major               (resident VMEM)
    w2_ref   : (3, 3*odim, odim) conv2 weight, [time-tap, j*odim+c, o] (resident VMEM)
    wl_ref   : (F2*odim, odim)   linear weight, row = f2*odim + c      (resident VMEM)
    o_ref    : (1, t2_tile, odim)
    y1_ref   : VMEM scratch (2*nt, F1*odim)   conv1 activations (bf16)
    y2_ref   : VMEM scratch (t2_tile, F2*odim) conv2 activations (bf16)
    """
    # ---- conv1 + ReLU -> y1 scratch -------------------------------------------------
    w1 = w1_ref[...]                                               # (9, odim) bf16
    b1 = jnp.broadcast_to(b1_ref[...], (2 * nt, odim))             # hoisted broadcast
    for f1 in range(F1):
        lhs = xpat_ref[0, :, f1 * 9:(f1 + 1) * 9]                  # (2*nt, 9)
        a = jnp.dot(lhs, w1, preferred_element_type=jnp.float32)   # (2*nt, odim) f32
        y1_ref[:, f1 * odim:(f1 + 1) * odim] = jnp.maximum(a + b1, 0.0).astype(cdt)

    # ---- conv2 + ReLU -> y2 scratch --------------------------------------------------
    # conv2 time tap i -> (conv1 time-phase pt, row offset dt); stride-2 time access is
    # a contiguous static row slice of the per-phase conv1 output.
    b2 = jnp.broadcast_to(b2_ref[...], (t2_tile, odim))
    time_taps = ((0, 0), (1, 0), (0, 1))
    # TODO(synk): for very large F2 a lax.fori_loop over f2 (pl.ds column offsets) would
    #             further bound code size; kept static so all lane offsets are constants.
    for f2 in range(F2):
        c0 = 2 * f2 * odim                                         # freq taps 2*f2..2*f2+2
        acc2 = jnp.zeros((t2_tile, odim), jnp.float32)
        for i, (pt, dt) in enumerate(time_taps):
            r0 = pt * nt + dt
            lhs = y1_ref[r0:r0 + t2_tile, c0:c0 + 3 * odim]        # (t2_tile, 3*odim)
            acc2 = acc2 + jnp.dot(lhs, w2_ref[i],
                                  preferred_element_type=jnp.float32)
        y2_ref[:, f2 * odim:(f2 + 1) * odim] = jnp.maximum(acc2 + b2, 0.0).astype(cdt)

    # ---- Linear (single large-K matmul over all F2 frequency bins) -------------------
    out = jnp.dot(y2_ref[...], wl_ref[...], preferred_element_type=jnp.float32)
    o_ref[0] = (out + bl_ref[...]).astype(o_ref.dtype)
    # TODO(synk): lane-dense output staging for odim not a multiple of 128; production
    #             sizes (odim=128/256/512) store full lanes already.
    # TODO(synk): if the MXU is the binding slot on v6e/v7x, move conv1's K=9 taps to
    #             the VPU so they overlap conv2's MXU streaming.


# ------------------------------ JAX-side glue ------------------------------ #
def _round_up(x, m):
    return (x + m - 1) // m * m


def _pick_t2_tile(T2, F1, F2, odim, out_itemsize, vmem_budget_bytes):
    """Largest power-of-two time tile (<=256) whose per-step VMEM footprint fits."""
    def footprint(t2):
        nt = t2 + 1
        xpat_b = 2 * (2 * nt) * _round_up(F1 * 9, 128) * 2          # pipelined input x2
        y1_b = (2 * nt) * _round_up(F1 * odim, 128) * 2             # conv1 scratch bf16
        y2_b = t2 * _round_up(F2 * odim, 128) * 2                   # conv2 scratch bf16
        out_b = 2 * _round_up(t2, 8) * _round_up(odim, 128) * out_itemsize
        w_b = (9 * odim + 9 * odim * odim + F2 * odim * odim) * 2 + 3 * 512
        return xpat_b + y1_b + y2_b + out_b + w_b

    cand = 256
    while cand > 8 and footprint(min(cand, T2)) > vmem_budget_bytes:
        cand //= 2
    return max(1, min(cand, T2))


def _build_phase_patches(x, t2_tile, n_tiles, t2_pad, F1, dtype):
    """Polyphase/im2col rearrangement of the raw input (done once, in XLA).

    Returns xpat of shape (B*n_tiles, 2*nt, F1*9) with
      xpat[b*n_tiles+it, pt*nt+tt, f1*9 + 3*i+j] = x[b, 4*(it*t2_tile+tt) + 2*pt + i, 2*f1+j]
    (zero padded past the end of the time axis).  The minor dim is F1*9 (lane-dense),
    and conv2's stride-2 time access becomes a contiguous row slice inside the kernel.
    """
    B, T, _ = x.shape
    ntg = t2_pad + 1                              # global per-phase conv1 rows (+halo)
    tp = max(T, 4 * t2_pad + 5)                   # padded time length covering all taps
    x_pad = jnp.pad(x, ((0, 0), (0, tp - T), (0, 0)))
    nt = t2_tile + 1

    phases = []
    for pt in range(2):
        taps = []
        for i in range(3):
            for j in range(3):
                r0 = 2 * pt + i
                sl = x_pad[:, r0: r0 + 4 * (ntg - 1) + 1: 4,
                           j: j + 2 * (F1 - 1) + 1: 2]              # (B, ntg, F1)
                taps.append(sl)
        phases.append(jnp.stack(taps, axis=-1))                     # (B, ntg, F1, 9)
    xg = jnp.stack(phases, axis=1)                                  # (B, 2, ntg, F1, 9)
    xg = xg.reshape(B, 2, ntg, F1 * 9)                              # minor: f1-major, tap-minor

    chunks = [xg[:, :, it * t2_tile: it * t2_tile + nt, :]          # +1 time-row halo
              for it in range(n_tiles)]
    xpat = jnp.stack(chunks, axis=1)                   # (B, n_tiles, 2, nt, F1*9)
    return xpat.reshape(B * n_tiles, 2 * nt, F1 * 9).astype(dtype)


def conv2d_subsampling4_forward(x, x_mask, params, *, t2_tile=None,
                                compute_dtype=jnp.bfloat16,
                                vmem_limit_bytes=48 * 1024 * 1024):
    """Matches Conv2dSubsampling4.forward: returns (out, subsampled_mask)."""
    w1, b1, w2, b2, wl, bl = params
    B, T, idim = x.shape
    odim = w1.shape[0]
    T1 = (T - 3) // 2 + 1
    F1 = (idim - 3) // 2 + 1
    T2 = (T1 - 3) // 2 + 1
    F2 = (F1 - 3) // 2 + 1
    assert wl.shape == (odim, odim * F2)

    if t2_tile is None:
        t2_tile = _pick_t2_tile(T2, F1, F2, odim, jnp.dtype(x.dtype).itemsize,
                                int(0.75 * vmem_limit_bytes))
    n_tiles = pl.cdiv(T2, t2_tile)
    t2_pad = n_tiles * t2_tile
    M = B * n_tiles
    nt = t2_tile + 1

    # ---- trace-time weight permutations (fold both PyTorch transposes) ----
    w1r = w1.reshape(odim, 9).T.astype(compute_dtype)                     # (9, O)
    w2r = jnp.transpose(w2, (2, 3, 1, 0)).reshape(3, 3 * odim, odim)      # [i, j*O+c, o]
    w2r = w2r.astype(compute_dtype)
    wlf = jnp.transpose(wl.reshape(odim, odim, F2), (2, 1, 0))            # [f, c, o]
    wlf = wlf.reshape(F2 * odim, odim).astype(compute_dtype)
    b1r = b1.reshape(1, odim).astype(jnp.float32)
    b2r = b2.reshape(1, odim).astype(jnp.float32)
    blr = bl.reshape(1, odim).astype(jnp.float32)

    # ---- cheap polyphase im2col of the raw input (smallest tensor in the chain) ----
    xpat = _build_phase_patches(x, t2_tile, n_tiles, t2_pad, F1, compute_dtype)

    kernel = functools.partial(_subsample4_kernel, F1=F1, F2=F2, t2_tile=t2_tile,
                               nt=nt, odim=odim, cdt=compute_dtype)

    flops = 2 * B * (T1 * F1 * 9 * odim
                     + T2 * F2 * 9 * odim * odim
                     + T2 * F2 * odim * odim)
    bytes_accessed = (xpat.size * xpat.dtype.itemsize
                      + w1r.size * w1r.dtype.itemsize
                      + w2r.size * w2r.dtype.itemsize
                      + wlf.size * wlf.dtype.itemsize
                      + (b1r.size + b2r.size + blr.size) * 4
                      + M * t2_tile * odim * x.dtype.itemsize)

    # Resident weights/biases: whole array in VMEM, copied once, NOT double-buffered.
    wspec = pl.BlockSpec(memory_space=pltpu.MemorySpace.VMEM)

    out = pl.pallas_call(
        kernel,
        out_shape=jax.ShapeDtypeStruct((M, t2_tile, odim), x.dtype),
        grid=(M,),
        in_specs=[
            pl.BlockSpec((1, 2 * nt, F1 * 9), lambda m: (m, 0, 0)),   # activations (pipelined)
            wspec,   # w1
            wspec,   # b1
            wspec,   # w2
            wspec,   # b2
            wspec,   # wl
            wspec,   # bl
        ],
        out_specs=pl.BlockSpec((1, t2_tile, odim), lambda m: (m, 0, 0)),
        scratch_shapes=[pltpu.VMEM((2 * nt, F1 * odim), compute_dtype),   # y1
                        pltpu.VMEM((t2_tile, F2 * odim), compute_dtype)], # y2
        compiler_params=pltpu.CompilerParams(
            dimension_semantics=("parallel",),
            vmem_limit_bytes=vmem_limit_bytes),
        cost_estimate=pl.CostEstimate(flops=flops, transcendentals=0,
                                      bytes_accessed=bytes_accessed),
    )(xpat, w1r, b1r, w2r, b2r, wlf, blr)

    y = out.reshape(B, t2_pad, odim)[:, :T2, :]       # drop zero-padded tail tiles
    mask_out = x_mask[:, :, 2::2][:, :, 2::2]         # trivial bool slicing: stays in JAX
    return y, mask_out


# --------------------------- pure-JAX reference ----------------------------- #
def _reference_forward(x, x_mask, params):
    w1, b1, w2, b2, wl, bl = params
    xi = x[:, None, :, :]
    y = lax.conv_general_dilated(xi, w1, (2, 2), "VALID",
                                 dimension_numbers=("NCHW", "OIHW", "NCHW"))
    y = jax.nn.relu(y + b1[None, :, None, None])
    y = lax.conv_general_dilated(y, w2, (2, 2), "VALID",
                                 dimension_numbers=("NCHW", "OIHW", "NCHW"))
    y = jax.nn.relu(y + b2[None, :, None, None])
    b_, c, t, f = y.shape
    y = jnp.transpose(y, (0, 2, 1, 3)).reshape(b_, t, c * f)
    y = y @ wl.T + bl
    return y, x_mask[:, :, 2::2][:, :, 2::2]


# ---------------------------------- main ------------------------------------ #
if __name__ == "__main__":
    B, T, idim, odim = 2, 16, 16, 32
    f_sub = ((idim - 1) // 2 - 1) // 2
    lin_in = odim * f_sub

    key = jax.random.PRNGKey(0)
    k = jax.random.split(key, 8)
    # PyTorch layouts: conv weights OIHW, linear weight (out, in).
    w1 = 0.2 * jax.random.normal(k[0], (odim, 1, 3, 3), jnp.float32)
    b1 = 0.1 * jax.random.normal(k[1], (odim,), jnp.float32)
    w2 = 0.05 * jax.random.normal(k[2], (odim, odim, 3, 3), jnp.float32)
    b2 = 0.1 * jax.random.normal(k[3], (odim,), jnp.float32)
    wl = 0.05 * jax.random.normal(k[4], (odim, lin_in), jnp.float32)
    bl = 0.1 * jax.random.normal(k[5], (odim,), jnp.float32)
    params = (w1, b1, w2, b2, wl, bl)

    x = jax.random.normal(k[6], (B, T, idim), jnp.float32)
    x_mask = jnp.ones((B, 1, T), dtype=jnp.bool_)

    fwd = jax.jit(conv2d_subsampling4_forward,
                  static_argnames=("t2_tile", "compute_dtype", "vmem_limit_bytes"))

    out, mask_out = fwd(x, x_mask, params)
    out = jax.block_until_ready(out)
    mask_out = jax.block_until_ready(mask_out)

    ref_out, ref_mask = _reference_forward(x, x_mask, params)
    assert out.shape == ref_out.shape, (out.shape, ref_out.shape)
    assert mask_out.shape == ref_mask.shape
    err = float(jnp.max(jnp.abs(out - ref_out)))
    assert jnp.allclose(out, ref_out, rtol=3e-2, atol=3e-2), f"mismatch (max abs err {err})"
    assert bool(jnp.all(mask_out == ref_mask))

    # Exercise the multi-tile (time-chunked) path as well: T2=3 with t2_tile=2
    # -> 2 chunks per batch element, last chunk zero-padded and sliced off.
    out2, mask2 = fwd(x, x_mask, params, t2_tile=2)
    out2 = jax.block_until_ready(out2)
    err2 = float(jnp.max(jnp.abs(out2 - ref_out)))
    assert jnp.allclose(out2, ref_out, rtol=3e-2, atol=3e-2), f"tiled mismatch ({err2})"
    assert bool(jnp.all(mask2 == ref_mask))

    print("KERNEL_OK")
</pallas_src>

<mosaic_0001>
module attributes {stable_mosaic.version = 11 : i64} {
  func.func @_subsample4_kernel(%arg0: i32, %arg1: memref<1x8x63xbf16, #tpu.memory_space<vmem>>, %arg2: memref<9x32xbf16, #tpu.memory_space<vmem>>, %arg3: memref<1x32xf32, #tpu.memory_space<vmem>>, %arg4: memref<3x96x32xbf16, #tpu.memory_space<vmem>>, %arg5: memref<1x32xf32, #tpu.memory_space<vmem>>, %arg6: memref<96x32xbf16, #tpu.memory_space<vmem>>, %arg7: memref<1x32xf32, #tpu.memory_space<vmem>>, %arg8: memref<1x3x32xf32, #tpu.memory_space<vmem>>, %arg9: memref<8x224xbf16, #tpu.memory_space<vmem>>, %arg10: memref<3x96xbf16, #tpu.memory_space<vmem>>) attributes {dimension_semantics = [#tpu.dimension_semantics<parallel>], iteration_bounds = array<i64: 2>, scalar_prefetch = 0 : i64, scratch_operands = 2 : i64, tpu.core_type = #tpu.core_type<tc>, window_params = [{transform_indices = @transform_0, window_bounds = array<i64: 1, 8, 63>}, {pipeline_mode = #tpu.pipeline_mode<synchronous>, transform_indices = @transform_1, window_bounds = array<i64: 9, 32>}, {pipeline_mode = #tpu.pipeline_mode<synchronous>, transform_indices = @transform_2, window_bounds = array<i64: 1, 32>}, {pipeline_mode = #tpu.pipeline_mode<synchronous>, transform_indices = @transform_3, window_bounds = array<i64: 3, 96, 32>}, {pipeline_mode = #tpu.pipeline_mode<synchronous>, transform_indices = @transform_4, window_bounds = array<i64: 1, 32>}, {pipeline_mode = #tpu.pipeline_mode<synchronous>, transform_indices = @transform_5, window_bounds = array<i64: 96, 32>}, {pipeline_mode = #tpu.pipeline_mode<synchronous>, transform_indices = @transform_6, window_bounds = array<i64: 1, 32>}, {transform_indices = @transform_7, window_bounds = array<i64: 1, 3, 32>}]} {
    %c0 = arith.constant 0 : index
    %c0_0 = arith.constant 0 : index
    %0 = vector.load %arg2[%c0, %c0_0] : memref<9x32xbf16, #tpu.memory_space<vmem>>, vector<9x32xbf16>
    %c0_1 = arith.constant 0 : index
    %c0_2 = arith.constant 0 : index
    %1 = vector.load %arg3[%c0_1, %c0_2] : memref<1x32xf32, #tpu.memory_space<vmem>>, vector<1x32xf32>
    %2 = vector.shape_cast %1 : vector<1x32xf32> to vector<1x32xf32>
    %3 = vector.broadcast %2 : vector<1x32xf32> to vector<8x32xf32>
    %c0_3 = arith.constant 0 : index
    %c0_4 = arith.constant 0 : index
    %c0_5 = arith.constant 0 : index
    %4 = vector.load %arg1[%c0_3, %c0_4, %c0_5] : memref<1x8x63xbf16, #tpu.memory_space<vmem>>, vector<1x8x9xbf16>
    %5 = vector.shape_cast %4 : vector<1x8x9xbf16> to vector<8x9xbf16>
    %cst = arith.constant dense<0.000000e+00> : vector<8x32xf32>
    %6 = tpu.matmul %5, %0, %cst {dimension_numbers = #tpu.dot_dimension_numbers<[1], [0], [0], [1], [0, 0, 1, 1], [], []>} : vector<8x9xbf16>, vector<9x32xbf16>, vector<8x32xf32> -> vector<8x32xf32>
    %7 = arith.addf %6, %3 : vector<8x32xf32>
    %cst_6 = arith.constant 0.000000e+00 : f32
    %8 = vector.broadcast %cst_6 : f32 to vector<8x32xf32>
    %9 = arith.maximumf %7, %8 : vector<8x32xf32>
    %10 = arith.truncf %9 : vector<8x32xf32> to vector<8x32xbf16>
    %c0_7 = arith.constant 0 : index
    %c0_8 = arith.constant 0 : index
    %11 = vector.load %arg9[%c0_7, %c0_8] : memref<8x224xbf16, #tpu.memory_space<vmem>>, vector<8x32xbf16>
    tpu.vector_store %arg9[%c0_7, %c0_8], %10 {strides = array<i32>} : memref<8x224xbf16, #tpu.memory_space<vmem>>, vector<8x32xbf16>,
    %c0_9 = arith.constant 0 : index
    %c0_10 = arith.constant 0 : index
    %c9 = arith.constant 9 : index
    %12 = vector.load %arg1[%c0_9, %c0_10, %c9] : memref<1x8x63xbf16, #tpu.memory_space<vmem>>, vector<1x8x9xbf16>
    %13 = vector.shape_cast %12 : vector<1x8x9xbf16> to vector<8x9xbf16>
    %cst_11 = arith.constant dense<0.000000e+00> : vector<8x32xf32>
    %14 = tpu.matmul %13, %0, %cst_11 {dimension_numbers = #tpu.dot_dimension_numbers<[1], [0], [0], [1], [0, 0, 1, 1], [], []>} : vector<8x9xbf16>, vector<9x32xbf16>, vector<8x32xf32> -> vector<8x32xf32>
    %15 = arith.addf %14, %3 : vector<8x32xf32>
    %cst_12 = arith.constant 0.000000e+00 : f32
    %16 = vector.broadcast %cst_12 : f32 to vector<8x32xf32>
    %17 = arith.maximumf %15, %16 : vector<8x32xf32>
    %18 = arith.truncf %17 : vector<8x32xf32> to vector<8x32xbf16>
    %c0_13 = arith.constant 0 : index
    %c32 = arith.constant 32 : index
    %19 = vector.load %arg9[%c0_13, %c32] : memref<8x224xbf16, #tpu.memory_space<vmem>>, vector<8x32xbf16>
    tpu.vector_store %arg9[%c0_13, %c32], %18 {strides = array<i32>} : memref<8x224xbf16, #tpu.memory_space<vmem>>, vector<8x32xbf16>,
    %c0_14 = arith.constant 0 : index
    %c0_15 = arith.constant 0 : index
    %c18 = arith.constant 18 : index
    %20 = vector.load %arg1[%c0_14, %c0_15, %c18] : memref<1x8x63xbf16, #tpu.memory_space<vmem>>, vector<1x8x9xbf16>
    %21 = vector.shape_cast %20 : vector<1x8x9xbf16> to vector<8x9xbf16>
    %cst_16 = arith.constant dense<0.000000e+00> : vector<8x32xf32>
    %22 = tpu.matmul %21, %0, %cst_16 {dimension_numbers = #tpu.dot_dimension_numbers<[1], [0], [0], [1], [0, 0, 1, 1], [], []>} : vector<8x9xbf16>, vector<9x32xbf16>, vector<8x32xf32> -> vector<8x32xf32>
    %23 = arith.addf %22, %3 : vector<8x32xf32>
    %cst_17 = arith.constant 0.000000e+00 : f32
    %24 = vector.broadcast %cst_17 : f32 to vector<8x32xf32>
    %25 = arith.maximumf %23, %24 : vector<8x32xf32>
    %26 = arith.truncf %25 : vector<8x32xf32> to vector<8x32xbf16>
    %c0_18 = arith.constant 0 : index
    %c64 = arith.constant 64 : index
    %27 = vector.load %arg9[%c0_18, %c64] : memref<8x224xbf16, #tpu.memory_space<vmem>>, vector<8x32xbf16>
    tpu.vector_store %arg9[%c0_18, %c64], %26 {strides = array<i32>} : memref<8x224xbf16, #tpu.memory_space<vmem>>, vector<8x32xbf16>,
    %c0_19 = arith.constant 0 : index
    %c0_20 = arith.constant 0 : index
    %c27 = arith.constant 27 : index
    %28 = vector.load %arg1[%c0_19, %c0_20, %c27] : memref<1x8x63xbf16, #tpu.memory_space<vmem>>, vector<1x8x9xbf16>
    %29 = vector.shape_cast %28 : vector<1x8x9xbf16> to vector<8x9xbf16>
    %cst_21 = arith.constant dense<0.000000e+00> : vector<8x32xf32>
    %30 = tpu.matmul %29, %0, %cst_21 {dimension_numbers = #tpu.dot_dimension_numbers<[1], [0], [0], [1], [0, 0, 1, 1], [], []>} : vector<8x9xbf16>, vector<9x32xbf16>, vector<8x32xf32> -> vector<8x32xf32>
    %31 = arith.addf %30, %3 : vector<8x32xf32>
    %cst_22 = arith.constant 0.000000e+00 : f32
    %32 = vector.broadcast %cst_22 : f32 to vector<8x32xf32>
    %33 = arith.maximumf %31, %32 : vector<8x32xf32>
    %34 = arith.truncf %33 : vector<8x32xf32> to vector<8x32xbf16>
    %c0_23 = arith.constant 0 : index
    %c96 = arith.constant 96 : index
    %35 = vector.load %arg9[%c0_23, %c96] : memref<8x224xbf16, #tpu.memory_space<vmem>>, vector<8x32xbf16>
    tpu.vector_store %arg9[%c0_23, %c96], %34 {strides = array<i32>} : memref<8x224xbf16, #tpu.memory_space<vmem>>, vector<8x32xbf16>,
    %c0_24 = arith.constant 0 : index
    %c0_25 = arith.constant 0 : index
    %c36 = arith.constant 36 : index
    %36 = vector.load %arg1[%c0_24, %c0_25, %c36] : memref<1x8x63xbf16, #tpu.memory_space<vmem>>, vector<1x8x9xbf16>
    %37 = vector.shape_cast %36 : vector<1x8x9xbf16> to vector<8x9xbf16>
    %cst_26 = arith.constant dense<0.000000e+00> : vector<8x32xf32>
    %38 = tpu.matmul %37, %0, %cst_26 {dimension_numbers = #tpu.dot_dimension_numbers<[1], [0], [0], [1], [0, 0, 1, 1], [], []>} : vector<8x9xbf16>, vector<9x32xbf16>, vector<8x32xf32> -> vector<8x32xf32>
    %39 = arith.addf %38, %3 : vector<8x32xf32>
    %cst_27 = arith.constant 0.000000e+00 : f32
    %40 = vector.broadcast %cst_27 : f32 to vector<8x32xf32>
    %41 = arith.maximumf %39, %40 : vector<8x32xf32>
    %42 = arith.truncf %41 : vector<8x32xf32> to vector<8x32xbf16>
    %c0_28 = arith.constant 0 : index
    %c128 = arith.constant 128 : index
    %43 = vector.load %arg9[%c0_28, %c128] : memref<8x224xbf16, #tpu.memory_space<vmem>>, vector<8x32xbf16>
    tpu.vector_store %arg9[%c0_28, %c128], %42 {strides = array<i32>} : memref<8x224xbf16, #tpu.memory_space<vmem>>, vector<8x32xbf16>,
    %c0_29 = arith.constant 0 : index
    %c0_30 = arith.constant 0 : index
    %c45 = arith.constant 45 : index
    %44 = vector.load %arg1[%c0_29, %c0_30, %c45] : memref<1x8x63xbf16, #tpu.memory_space<vmem>>, vector<1x8x9xbf16>
    %45 = vector.shape_cast %44 : vector<1x8x9xbf16> to vector<8x9xbf16>
    %cst_31 = arith.constant dense<0.000000e+00> : vector<8x32xf32>
    %46 = tpu.matmul %45, %0, %cst_31 {dimension_numbers = #tpu.dot_dimension_numbers<[1], [0], [0], [1], [0, 0, 1, 1], [], []>} : vector<8x9xbf16>, vector<9x32xbf16>, vector<8x32xf32> -> vector<8x32xf32>
    %47 = arith.addf %46, %3 : vector<8x32xf32>
    %cst_32 = arith.constant 0.000000e+00 : f32
    %48 = vector.broadcast %cst_32 : f32 to vector<8x32xf32>
    %49 = arith.maximumf %47, %48 : vector<8x32xf32>
    %50 = arith.truncf %49 : vector<8x32xf32> to vector<8x32xbf16>
    %c0_33 = arith.constant 0 : index
    %c160 = arith.constant 160 : index
    %51 = vector.load %arg9[%c0_33, %c160] : memref<8x224xbf16, #tpu.memory_space<vmem>>, vector<8x32xbf16>
    tpu.vector_store %arg9[%c0_33, %c160], %50 {strides = array<i32>} : memref<8x224xbf16, #tpu.memory_space<vmem>>, vector<8x32xbf16>,
    %c0_34 = arith.constant 0 : index
    %c0_35 = arith.constant 0 : index
    %c54 = arith.constant 54 : index
    %52 = vector.load %arg1[%c0_34, %c0_35, %c54] : memref<1x8x63xbf16, #tpu.memory_space<vmem>>, vector<1x8x9xbf16>
    %53 = vector.shape_cast %52 : vector<1x8x9xbf16> to vector<8x9xbf16>
    %cst_36 = arith.constant dense<0.000000e+00> : vector<8x32xf32>
    %54 = tpu.matmul %53, %0, %cst_36 {dimension_numbers = #tpu.dot_dimension_numbers<[1], [0], [0], [1], [0, 0, 1, 1], [], []>} : vector<8x9xbf16>, vector<9x32xbf16>, vector<8x32xf32> -> vector<8x32xf32>
    %55 = arith.addf %54, %3 : vector<8x32xf32>
    %cst_37 = arith.constant 0.000000e+00 : f32
    %56 = vector.broadcast %cst_37 : f32 to vector<8x32xf32>
    %57 = arith.maximumf %55, %56 : vector<8x32xf32>
    %58 = arith.truncf %57 : vector<8x32xf32> to vector<8x32xbf16>
    %c0_38 = arith.constant 0 : index
    %c192 = arith.constant 192 : index
    %59 = vector.load %arg9[%c0_38, %c192] : memref<8x224xbf16, #tpu.memory_space<vmem>>, vector<8x32xbf16>
    tpu.vector_store %arg9[%c0_38, %c192], %58 {strides = array<i32>} : memref<8x224xbf16, #tpu.memory_space<vmem>>, vector<8x32xbf16>,
    %c0_39 = arith.constant 0 : index
    %c0_40 = arith.constant 0 : index
    %60 = vector.load %arg5[%c0_39, %c0_40] : memref<1x32xf32, #tpu.memory_space<vmem>>, vector<1x32xf32>
    %61 = vector.shape_cast %60 : vector<1x32xf32> to vector<1x32xf32>
    %62 = vector.broadcast %61 : vector<1x32xf32> to vector<3x32xf32>
    %cst_41 = arith.constant 0.000000e+00 : f32
    %63 = vector.broadcast %cst_41 : f32 to vector<3x32xf32>
    %c0_42 = arith.constant 0 : index
    %c0_43 = arith.constant 0 : index
    %64 = vector.load %arg9[%c0_42, %c0_43] : memref<8x224xbf16, #tpu.memory_space<vmem>>, vector<3x96xbf16>
    %c0_44 = arith.constant 0 : index
    %c0_45 = arith.constant 0 : index
    %c0_46 = arith.constant 0 : index
    %65 = vector.load %arg4[%c0_44, %c0_45, %c0_46] : memref<3x96x32xbf16, #tpu.memory_space<vmem>>, vector<1x96x32xbf16>
    %66 = vector.shape_cast %65 : vector<1x96x32xbf16> to vector<96x32xbf16>
    %cst_47 = arith.constant dense<0.000000e+00> : vector<3x32xf32>
    %67 = tpu.matmul %64, %66, %cst_47 {dimension_numbers = #tpu.dot_dimension_numbers<[1], [0], [0], [1], [0, 0, 1, 1], [], []>} : vector<3x96xbf16>, vector<96x32xbf16>, vector<3x32xf32> -> vector<3x32xf32>
    %68 = arith.addf %63, %67 : vector<3x32xf32>
    %c4 = arith.constant 4 : index
    %c0_48 = arith.constant 0 : index
    %69 = vector.load %arg9[%c4, %c0_48] : memref<8x224xbf16, #tpu.memory_space<vmem>>, vector<3x96xbf16>
    %c1 = arith.constant 1 : index
    %c0_49 = arith.constant 0 : index
    %c0_50 = arith.constant 0 : index
    %70 = vector.load %arg4[%c1, %c0_49, %c0_50] : memref<3x96x32xbf16, #tpu.memory_space<vmem>>, vector<1x96x32xbf16>
    %71 = vector.shape_cast %70 : vector<1x96x32xbf16> to vector<96x32xbf16>
    %cst_51 = arith.constant dense<0.000000e+00> : vector<3x32xf32>
    %72 = tpu.matmul %69, %71, %cst_51 {dimension_numbers = #tpu.dot_dimension_numbers<[1], [0], [0], [1], [0, 0, 1, 1], [], []>} : vector<3x96xbf16>, vector<96x32xbf16>, vector<3x32xf32> -> vector<3x32xf32>
    %73 = arith.addf %68, %72 : vector<3x32xf32>
    %c1_52 = arith.constant 1 : index
    %c0_53 = arith.constant 0 : index
    %74 = vector.load %arg9[%c1_52, %c0_53] : memref<8x224xbf16, #tpu.memory_space<vmem>>, vector<3x96xbf16>
    %c2 = arith.constant 2 : index
    %c0_54 = arith.constant 0 : index
    %c0_55 = arith.constant 0 : index
    %75 = vector.load %arg4[%c2, %c0_54, %c0_55] : memref<3x96x32xbf16, #tpu.memory_space<vmem>>, vector<1x96x32xbf16>
    %76 = vector.shape_cast %75 : vector<1x96x32xbf16> to vector<96x32xbf16>
    %cst_56 = arith.constant dense<0.000000e+00> : vector<3x32xf32>
    %77 = tpu.matmul %74, %76, %cst_56 {dimension_numbers = #tpu.dot_dimension_numbers<[1], [0], [0], [1], [0, 0, 1, 1], [], []>} : vector<3x96xbf16>, vector<96x32xbf16>, vector<3x32xf32> -> vector<3x32xf32>
    %78 = arith.addf %73, %77 : vector<3x32xf32>
    %79 = arith.addf %78, %62 : vector<3x32xf32>
    %cst_57 = arith.constant 0.000000e+00 : f32
    %80 = vector.broadcast %cst_57 : f32 to vector<3x32xf32>
    %81 = arith.maximumf %79, %80 : vector<3x32xf32>
    %82 = arith.truncf %81 : vector<3x32xf32> to vector<3x32xbf16>
    %c0_58 = arith.constant 0 : index
    %c0_59 = arith.constant 0 : index
    %83 = vector.load %arg10[%c0_58, %c0_59] : memref<3x96xbf16, #tpu.memory_space<vmem>>, vector<3x32xbf16>
    tpu.vector_store %arg10[%c0_58, %c0_59], %82 {strides = array<i32>} : memref<3x96xbf16, #tpu.memory_space<vmem>>, vector<3x32xbf16>,
    %cst_60 = arith.constant 0.000000e+00 : f32
    %84 = vector.broadcast %cst_60 : f32 to vector<3x32xf32>
    %c0_61 = arith.constant 0 : index
    %c64_62 = arith.constant 64 : index
    %85 = vector.load %arg9[%c0_61, %c64_62] : memref<8x224xbf16, #tpu.memory_space<vmem>>, vector<3x96xbf16>
    %c0_63 = arith.constant 0 : index
    %c0_64 = arith.constant 0 : index
    %c0_65 = arith.constant 0 : index
    %86 = vector.load %arg4[%c0_63, %c0_64, %c0_65] : memref<3x96x32xbf16, #tpu.memory_space<vmem>>, vector<1x96x32xbf16>
    %87 = vector.shape_cast %86 : vector<1x96x32xbf16> to vector<96x32xbf16>
    %cst_66 = arith.constant dense<0.000000e+00> : vector<3x32xf32>
    %88 = tpu.matmul %85, %87, %cst_66 {dimension_numbers = #tpu.dot_dimension_numbers<[1], [0], [0], [1], [0, 0, 1, 1], [], []>} : vector<3x96xbf16>, vector<96x32xbf16>, vector<3x32xf32> -> vector<3x32xf32>
    %89 = arith.addf %84, %88 : vector<3x32xf32>
    %c4_67 = arith.constant 4 : index
    %c64_68 = arith.constant 64 : index
    %90 = vector.load %arg9[%c4_67, %c64_68] : memref<8x224xbf16, #tpu.memory_space<vmem>>, vector<3x96xbf16>
    %c1_69 = arith.constant 1 : index
    %c0_70 = arith.constant 0 : index
    %c0_71 = arith.constant 0 : index
    %91 = vector.load %arg4[%c1_69, %c0_70, %c0_71] : memref<3x96x32xbf16, #tpu.memory_space<vmem>>, vector<1x96x32xbf16>
    %92 = vector.shape_cast %91 : vector<1x96x32xbf16> to vector<96x32xbf16>
    %cst_72 = arith.constant dense<0.000000e+00> : vector<3x32xf32>
    %93 = tpu.matmul %90, %92, %cst_72 {dimension_numbers = #tpu.dot_dimension_numbers<[1], [0], [0], [1], [0, 0, 1, 1], [], []>} : vector<3x96xbf16>, vector<96x32xbf16>, vector<3x32xf32> -> vector<3x32xf32>
    %94 = arith.addf %89, %93 : vector<3x32xf32>
    %c1_73 = arith.constant 1 : index
    %c64_74 = arith.constant 64 : index
    %95 = vector.load %arg9[%c1_73, %c64_74] : memref<8x224xbf16, #tpu.memory_space<vmem>>, vector<3x96xbf16>
    %c2_75 = arith.constant 2 : index
    %c0_76 = arith.constant 0 : index
    %c0_77 = arith.constant 0 : index
    %96 = vector.load %arg4[%c2_75, %c0_76, %c0_77] : memref<3x96x32xbf16, #tpu.memory_space<vmem>>, vector<1x96x32xbf16>
    %97 = vector.shape_cast %96 : vector<1x96x32xbf16> to vector<96x32xbf16>
    %cst_78 = arith.constant dense<0.000000e+00> : vector<3x32xf32>
    %98 = tpu.matmul %95, %97, %cst_78 {dimension_numbers = #tpu.dot_dimension_numbers<[1], [0], [0], [1], [0, 0, 1, 1], [], []>} : vector<3x96xbf16>, vector<96x32xbf16>, vector<3x32xf32> -> vector<3x32xf32>
    %99 = arith.addf %94, %98 : vector<3x32xf32>
    %100 = arith.addf %99, %62 : vector<3x32xf32>
    %cst_79 = arith.constant 0.000000e+00 : f32
    %101 = vector.broadcast %cst_79 : f32 to vector<3x32xf32>
    %102 = arith.maximumf %100, %101 : vector<3x32xf32>
    %103 = arith.truncf %102 : vector<3x32xf32> to vector<3x32xbf16>
    %c0_80 = arith.constant 0 : index
    %c32_81 = arith.constant 32 : index
    %104 = vector.load %arg10[%c0_80, %c32_81] : memref<3x96xbf16, #tpu.memory_space<vmem>>, vector<3x32xbf16>
    tpu.vector_store %arg10[%c0_80, %c32_81], %103 {strides = array<i32>} : memref<3x96xbf16, #tpu.memory_space<vmem>>, vector<3x32xbf16>,
    %cst_82 = arith.constant 0.000000e+00 : f32
    %105 = vector.broadcast %cst_82 : f32 to vector<3x32xf32>
    %c0_83 = arith.constant 0 : index
    %c128_84 = arith.constant 128 : index
    %106 = vector.load %arg9[%c0_83, %c128_84] : memref<8x224xbf16, #tpu.memory_space<vmem>>, vector<3x96xbf16>
    %c0_85 = arith.constant 0 : index
    %c0_86 = arith.constant 0 : index
    %c0_87 = arith.constant 0 : index
    %107 = vector.load %arg4[%c0_85, %c0_86, %c0_87] : memref<3x96x32xbf16, #tpu.memory_space<vmem>>, vector<1x96x32xbf16>
    %108 = vector.shape_cast %107 : vector<1x96x32xbf16> to vector<96x32xbf16>
    %cst_88 = arith.constant dense<0.000000e+00> : vector<3x32xf32>
    %109 = tpu.matmul %106, %108, %cst_88 {dimension_numbers = #tpu.dot_dimension_numbers<[1], [0], [0], [1], [0, 0, 1, 1], [], []>} : vector<3x96xbf16>, vector<96x32xbf16>, vector<3x32xf32> -> vector<3x32xf32>
    %110 = arith.addf %105, %109 : vector<3x32xf32>
    %c4_89 = arith.constant 4 : index
    %c128_90 = arith.constant 128 : index
    %111 = vector.load %arg9[%c4_89, %c128_90] : memref<8x224xbf16, #tpu.memory_space<vmem>>, vector<3x96xbf16>
    %c1_91 = arith.constant 1 : index
    %c0_92 = arith.constant 0 : index
    %c0_93 = arith.constant 0 : index
    %112 = vector.load %arg4[%c1_91, %c0_92, %c0_93] : memref<3x96x32xbf16, #tpu.memory_space<vmem>>, vector<1x96x32xbf16>
    %113 = vector.shape_cast %112 : vector<1x96x32xbf16> to vector<96x32xbf16>
    %cst_94 = arith.constant dense<0.000000e+00> : vector<3x32xf32>
    %114 = tpu.matmul %111, %113, %cst_94 {dimension_numbers = #tpu.dot_dimension_numbers<[1], [0], [0], [1], [0, 0, 1, 1], [], []>} : vector<3x96xbf16>, vector<96x32xbf16>, vector<3x32xf32> -> vector<3x32xf32>
    %115 = arith.addf %110, %114 : vector<3x32xf32>
    %c1_95 = arith.constant 1 : index
    %c128_96 = arith.constant 128 : index
    %116 = vector.load %arg9[%c1_95, %c128_96] : memref<8x224xbf16, #tpu.memory_space<vmem>>, vector<3x96xbf16>
    %c2_97 = arith.constant 2 : index
    %c0_98 = arith.constant 0 : index
    %c0_99 = arith.constant 0 : index
    %117 = vector.load %arg4[%c2_97, %c0_98, %c0_99] : memref<3x96x32xbf16, #tpu.memory_space<vmem>>, vector<1x96x32xbf16>
    %118 = vector.shape_cast %117 : vector<1x96x32xbf16> to vector<96x32xbf16>
    %cst_100 = arith.constant dense<0.000000e+00> : vector<3x32xf32>
    %119 = tpu.matmul %116, %118, %cst_100 {dimension_numbers = #tpu.dot_dimension_numbers<[1], [0], [0], [1], [0, 0, 1, 1], [], []>} : vector<3x96xbf16>, vector<96x32xbf16>, vector<3x32xf32> -> vector<3x32xf32>
    %120 = arith.addf %115, %119 : vector<3x32xf32>
    %121 = arith.addf %120, %62 : vector<3x32xf32>
    %cst_101 = arith.constant 0.000000e+00 : f32
    %122 = vector.broadcast %cst_101 : f32 to vector<3x32xf32>
    %123 = arith.maximumf %121, %122 : vector<3x32xf32>
    %124 = arith.truncf %123 : vector<3x32xf32> to vector<3x32xbf16>
    %c0_102 = arith.constant 0 : index
    %c64_103 = arith.constant 64 : index
    %125 = vector.load %arg10[%c0_102, %c64_103] : memref<3x96xbf16, #tpu.memory_space<vmem>>, vector<3x32xbf16>
    tpu.vector_store %arg10[%c0_102, %c64_103], %124 {strides = array<i32>} : memref<3x96xbf16, #tpu.memory_space<vmem>>, vector<3x32xbf16>,
    %c0_104 = arith.constant 0 : index
    %c0_105 = arith.constant 0 : index
    %126 = vector.load %arg10[%c0_104, %c0_105] : memref<3x96xbf16, #tpu.memory_space<vmem>>, vector<3x96xbf16>
    %c0_106 = arith.constant 0 : index
    %c0_107 = arith.constant 0 : index
    %127 = vector.load %arg6[%c0_106, %c0_107] : memref<96x32xbf16, #tpu.memory_space<vmem>>, vector<96x32xbf16>
    %cst_108 = arith.constant dense<0.000000e+00> : vector<3x32xf32>
    %128 = tpu.matmul %126, %127, %cst_108 {dimension_numbers = #tpu.dot_dimension_numbers<[1], [0], [0], [1], [0, 0, 1, 1], [], []>} : vector<3x96xbf16>, vector<96x32xbf16>, vector<3x32xf32> -> vector<3x32xf32>
    %c0_109 = arith.constant 0 : index
    %c0_110 = arith.constant 0 : index
    %129 = vector.load %arg7[%c0_109, %c0_110] : memref<1x32xf32, #tpu.memory_space<vmem>>, vector<1x32xf32>
    %130 = vector.broadcast %129 : vector<1x32xf32> to vector<3x32xf32>
    %131 = arith.addf %128, %130 : vector<3x32xf32>
    %c0_111 = arith.constant 0 : index
    %c0_112 = arith.constant 0 : index
    %c0_113 = arith.constant 0 : index
    %132 = vector.load %arg8[%c0_111, %c0_112, %c0_113] : memref<1x3x32xf32, #tpu.memory_space<vmem>>, vector<1x3x32xf32>
    %133 = vector.shape_cast %132 : vector<1x3x32xf32> to vector<3x32xf32>
    %134 = vector.shape_cast %131 : vector<3x32xf32> to vector<1x3x32xf32>
    tpu.vector_store %arg8[%c0_111, %c0_112, %c0_113], %134 {strides = array<i32>} : memref<1x3x32xf32, #tpu.memory_space<vmem>>, vector<1x3x32xf32>,
    return
  }
  func.func @transform_0(%arg0: i32) -> (i32, i32, i32) {
    %c0_i32 = arith.constant 0 : i32
    %c0_i32_0 = arith.constant 0 : i32
    %c0_i32_1 = arith.constant 0 : i32
    return %arg0, %c0_i32, %c0_i32_0 : i32, i32, i32
  }
  func.func @transform_1(%arg0: i32) -> (i32, i32) {
    %c0_i32 = arith.constant 0 : i32
    %c0_i32_0 = arith.constant 0 : i32
    %c0_i32_1 = arith.constant 0 : i32
    return %c0_i32, %c0_i32_0 : i32, i32
  }
  func.func @transform_2(%arg0: i32) -> (i32, i32) {
    %c0_i32 = arith.constant 0 : i32
    %c0_i32_0 = arith.constant 0 : i32
    %c0_i32_1 = arith.constant 0 : i32
    return %c0_i32, %c0_i32_0 : i32, i32
  }
  func.func @transform_3(%arg0: i32) -> (i32, i32, i32) {
    %c0_i32 = arith.constant 0 : i32
    %c0_i32_0 = arith.constant 0 : i32
    %c0_i32_1 = arith.constant 0 : i32
    %c0_i32_2 = arith.constant 0 : i32
    return %c0_i32, %c0_i32_0, %c0_i32_1 : i32, i32, i32
  }
  func.func @transform_4(%arg0: i32) -> (i32, i32) {
    %c0_i32 = arith.constant 0 : i32
    %c0_i32_0 = arith.constant 0 : i32
    %c0_i32_1 = arith.constant 0 : i32
    return %c0_i32, %c0_i32_0 : i32, i32
  }
  func.func @transform_5(%arg0: i32) -> (i32, i32) {
    %c0_i32 = arith.constant 0 : i32
    %c0_i32_0 = arith.constant 0 : i32
    %c0_i32_1 = arith.constant 0 : i32
    return %c0_i32, %c0_i32_0 : i32, i32
  }
  func.func @transform_6(%arg0: i32) -> (i32, i32) {
    %c0_i32 = arith.constant 0 : i32
    %c0_i32_0 = arith.constant 0 : i32
    %c0_i32_1 = arith.constant 0 : i32
    return %c0_i32, %c0_i32_0 : i32, i32
  }
  func.func @transform_7(%arg0: i32) -> (i32, i32, i32) {
    %c0_i32 = arith.constant 0 : i32
    %c0_i32_0 = arith.constant 0 : i32
    %c0_i32_1 = arith.constant 0 : i32
    return %arg0, %c0_i32, %c0_i32_0 : i32, i32, i32
  }
}

</mosaic_0001>

<llo_original>
// kernel: conv2d_subsampling4_forward.1
$region0: #{conv2d_subsampling4_forward.1}
  #allocation0 [shape = 'u32[]', space=smem, size = 0x4, offset = 0x4, fixed_abs, tag = 'smem constant byte address 0x4 - core index']
  #allocation1 [shape = 'u32[144,128]{1,0:T(1,128)}', space=vmem, size = 0x12000, scoped, tag = 'internal scratch']
  #allocation2 [shape = 'bf16[8,224]{1,0:T(8,128)(2,1)}', space=vmem, size = 0x1000, scoped, tag = 'scratch operand']
  #allocation3 [shape = 'bf16[3,96]{1,0:T(4,128)(2,1)}', space=vmem, size = 0x400, scoped, tag = 'scratch operand']
  %s0 = inlined_call_operand.vmem [shape: bf16[2,8,63], index: 0, kind: input, shape index: {}]
  %s1 = inlined_call_operand.vmem [shape: bf16[9,32], index: 1, kind: input, shape index: {}]
  %s2 = inlined_call_operand.vmem [shape: f32[1,32], index: 2, kind: input, shape index: {}]
  %s3 = inlined_call_operand.vmem [shape: bf16[3,96,32], index: 3, kind: input, shape index: {}]
  %s4 = inlined_call_operand.vmem [shape: f32[1,32], index: 4, kind: input, shape index: {}]
  %s5 = inlined_call_operand.vmem [shape: bf16[96,32], index: 5, kind: input, shape index: {}]
  %s6 = inlined_call_operand.vmem [shape: f32[1,32], index: 6, kind: input, shape index: {}]
  %s7 = inlined_call_operand.vmem [shape: f32[2,3,32], index: 7, kind: output, shape index: {}]
  %s8 = sld [smem:[#allocation0]]
  $region61: #{conv2d_subsampling4_forward.1} parent=0
    _
  %s10 = ssub.s32 1, %s8
  %s11 = scalar_select 0, %s10, %s8
  loop: start=0, step=1, limit=4
  $region2: #{conv2d_subsampling4_forward.1} parent=0 // loop_pre_header
    _
  $region3: #{conv2d_subsampling4_forward.1} parent=0 // loop_header
    %s13 = sphi 0, %s17
    %p14 = scmp.ge.s32.totalorder %s13, 4
    %s23 = sphi 0, %s25
    %s26 = sphi 0, %s23
    %s27 = sphi 0, %s26
    %s43 = sphi 0, %s27
    %s47 = sphi 0, %s47
    %s49 = sphi 0, %s47
    %s50 = sphi 0, %s49
    %s64 = sphi 0, %s50
    %s68 = sphi 0, %s68
    %s70 = sphi 0, %s68
    %s71 = sphi 0, %s70
    %s85 = sphi 0, %s71
    %s89 = sphi 0, %s89
    %s91 = sphi 0, %s89
    %s92 = sphi 0, %s91
    %s106 = sphi 0, %s92
    %s110 = sphi 0, %s110
    %s112 = sphi 0, %s110
    %s113 = sphi 0, %s112
    %s127 = sphi 0, %s113
    %s131 = sphi 0, %s131
    %s133 = sphi 0, %s131
    %s134 = sphi 0, %s133
    %s148 = sphi 0, %s134
    %s152 = sphi 0, %s152
    %s154 = sphi 0, %s152
    %s155 = sphi 0, %s154
    %s169 = sphi 0, %s155
    %s175 = sphi 0, %s177
    %s178 = sphi 0, %s175
    %s179 = sphi 0, %s178
    %s195 = sphi 0, %s179
  $region4: #{conv2d_subsampling4_forward.1} parent=0 // loop_header_branch
    %16 = sbr.rel (%p14) target = $region8
  $region5: #{conv2d_subsampling4_forward.1} parent=0 // loop_body
    %s18 = ssub.s32 %s13, 1
    %s19 = ssub.s32 %s13, 2
    %s20 = sadd.s32 %s13, 1
    %s21 = ssub.s32 %s13, %s20
    %p22 = scmp.eq.s32.totalorder %s21, 0
    %s24 = sadd.s32 %s23, 1
    %s25 = scalar_select %p22, %s23, %s24
    %p28 = pneg %p22
    %p29 = scmp.eq.s32.totalorder %s13, 1
    %p30 = por %p28, %p29
    %p31 = scmp.ne.s32.totalorder %s23, %s26
    %p32 = scmp.eq.s32.totalorder %s13, 0
    %p33 = por %p31, %p32
    %p34 = scmp.ne.s32.totalorder %s23, %s26
    %p35 = scmp.eq.s32.totalorder %s18, 1
    %p36 = por %p34, %p35
    %p37 = scmp.ne.s32.totalorder %s26, %s27
    %p38 = scmp.eq.s32.totalorder %s18, 0
    %p39 = por %p37, %p38
    %p40 = scmp.ne.s32.totalorder %s26, %s27
    %p41 = scmp.eq.s32.totalorder %s19, 1
    %p42 = por %p40, %p41
    %p44 = scmp.ne.s32.totalorder %s27, %s43
    %p45 = scmp.eq.s32.totalorder %s19, 0
    %p46 = por %p44, %p45
    %s48 = sadd.s32 %s47, 1
    %p51 = scmp.eq.s32.totalorder %s13, 1
    %p52 = scmp.ne.s32.totalorder %s47, %s49
    %p53 = scmp.eq.s32.totalorder %s13, 0
    %p54 = por %p52, %p53
    %p55 = scmp.ne.s32.totalorder %s47, %s49
    %p56 = scmp.eq.s32.totalorder %s18, 1
    %p57 = por %p55, %p56
    %p58 = scmp.ne.s32.totalorder %s49, %s50
    %p59 = scmp.eq.s32.totalorder %s18, 0
    %p60 = por %p58, %p59
    %p61 = scmp.ne.s32.totalorder %s49, %s50
    %p62 = scmp.eq.s32.totalorder %s19, 1
    %p63 = por %p61, %p62
    %p65 = scmp.ne.s32.totalorder %s50, %s64
    %p66 = scmp.eq.s32.totalorder %s19, 0
    %p67 = por %p65, %p66
    %s69 = sadd.s32 %s68, 1
    %p72 = scmp.eq.s32.totalorder %s13, 1
    %p73 = scmp.ne.s32.totalorder %s68, %s70
    %p74 = scmp.eq.s32.totalorder %s13, 0
    %p75 = por %p73, %p74
    %p76 = scmp.ne.s32.totalorder %s68, %s70
    %p77 = scmp.eq.s32.totalorder %s18, 1
    %p78 = por %p76, %p77
    %p79 = scmp.ne.s32.totalorder %s70, %s71
    %p80 = scmp.eq.s32.totalorder %s18, 0
    %p81 = por %p79, %p80
    %p82 = scmp.ne.s32.totalorder %s70, %s71
    %p83 = scmp.eq.s32.totalorder %s19, 1
    %p84 = por %p82, %p83
    %p86 = scmp.ne.s32.totalorder %s71, %s85
    %p87 = scmp.eq.s32.totalorder %s19, 0
    %p88 = por %p86, %p87
    %s90 = sadd.s32 %s89, 1
    %p93 = scmp.eq.s32.totalorder %s13, 1
    %p94 = scmp.ne.s32.totalorder %s89, %s91
    %p95 = scmp.eq.s32.totalorder %s13, 0
    %p96 = por %p94, %p95
    %p97 = scmp.ne.s32.totalorder %s89, %s91
    %p98 = scmp.eq.s32.totalorder %s18, 1
    %p99 = por %p97, %p98
    %p100 = scmp.ne.s32.totalorder %s91, %s92
    %p101 = scmp.eq.s32.totalorder %s18, 0
    %p102 = por %p100, %p101
    %p103 = scmp.ne.s32.totalorder %s91, %s92
    %p104 = scmp.eq.s32.totalorder %s19, 1
    %p105 = por %p103, %p104
    %p107 = scmp.ne.s32.totalorder %s92, %s106
    %p108 = scmp.eq.s32.totalorder %s19, 0
    %p109 = por %p107, %p108
    %s111 = sadd.s32 %s110, 1
    %p114 = scmp.eq.s32.totalorder %s13, 1
    %p115 = scmp.ne.s32.totalorder %s110, %s112
    %p116 = scmp.eq.s32.totalorder %s13, 0
    %p117 = por %p115, %p116
    %p118 = scmp.ne.s32.totalorder %s110, %s112
    %p119 = scmp.eq.s32.totalorder %s18, 1
    %p120 = por %p118, %p119
    %p121 = scmp.ne.s32.totalorder %s112, %s113
    %p122 = scmp.eq.s32.totalorder %s18, 0
    %p123 = por %p121, %p122
    %p124 = scmp.ne.s32.totalorder %s112, %s113
    %p125 = scmp.eq.s32.totalorder %s19, 1
    %p126 = por %p124, %p125
    %p128 = scmp.ne.s32.totalorder %s113, %s127
    %p129 = scmp.eq.s32.totalorder %s19, 0
    %p130 = por %p128, %p129
    %s132 = sadd.s32 %s131, 1
    %p135 = scmp.eq.s32.totalorder %s13, 1
    %p136 = scmp.ne.s32.totalorder %s131, %s133
    %p137 = scmp.eq.s32.totalorder %s13, 0
    %p138 = por %p136, %p137
    %p139 = scmp.ne.s32.totalorder %s131, %s133
    %p140 = scmp.eq.s32.totalorder %s18, 1
    %p141 = por %p139, %p140
    %p142 = scmp.ne.s32.totalorder %s133, %s134
    %p143 = scmp.eq.s32.totalorder %s18, 0
    %p144 = por %p142, %p143
    %p145 = scmp.ne.s32.totalorder %s133, %s134
    %p146 = scmp.eq.s32.totalorder %s19, 1
    %p147 = por %p145, %p146
    %p149 = scmp.ne.s32.totalorder %s134, %s148
    %p150 = scmp.eq.s32.totalorder %s19, 0
    %p151 = por %p149, %p150
    %s153 = sadd.s32 %s152, 1
    %p156 = scmp.eq.s32.totalorder %s13, 1
    %p157 = scmp.ne.s32.totalorder %s152, %s154
    %p158 = scmp.eq.s32.totalorder %s13, 0
    %p159 = por %p157, %p158
    %p160 = scmp.ne.s32.totalorder %s152, %s154
    %p161 = scmp.eq.s32.totalorder %s18, 1
    %p162 = por %p160, %p161
    %p163 = scmp.ne.s32.totalorder %s154, %s155
    %p164 = scmp.eq.s32.totalorder %s18, 0
    %p165 = por %p163, %p164
    %p166 = scmp.ne.s32.totalorder %s154, %s155
    %p167 = scmp.eq.s32.totalorder %s19, 1
    %p168 = por %p166, %p167
    %p170 = scmp.ne.s32.totalorder %s155, %s169
    %p171 = scmp.eq.s32.totalorder %s19, 0
    %p172 = por %p170, %p171
    %s173 = ssub.s32 %s13, %s20
    %p174 = scmp.eq.s32.totalorder %s173, 0
    %s176 = sadd.s32 %s175, 1
    %s177 = scalar_select %p174, %s175, %s176
    %p180 = pneg %p174
    %p181 = scmp.eq.s32.totalorder %s13, 1
    %p182 = por %p180, %p181
    %p183 = scmp.ne.s32.totalorder %s175, %s178
    %p184 = scmp.eq.s32.totalorder %s13, 0
    %p185 = por %p183, %p184
    %p186 = scmp.ne.s32.totalorder %s175, %s178
    %p187 = scmp.eq.s32.totalorder %s18, 1
    %p188 = por %p186, %p187
    %p189 = scmp.ne.s32.totalorder %s178, %s179
    %p190 = scmp.eq.s32.totalorder %s18, 0
    %p191 = por %p189, %p190
    %p192 = scmp.ne.s32.totalorder %s178, %s179
    %p193 = scmp.eq.s32.totalorder %s19, 1
    %p194 = por %p192, %p193
    %p196 = scmp.ne.s32.totalorder %s179, %s195
    %p197 = scmp.eq.s32.totalorder %s19, 0
    %p198 = por %p196, %p197
    %p199 = scmp.le.s32.totalorder 1, %s13
    %p200 = scmp.lt.s32.totalorder %s13, 3
    %p201 = pnand %p199, %p200
    %p202 = pneg %p201
    // Predicated region
    $region9: #{conv2d_subsampling4_forward.1} parent=5 // pred_check
      _
    $region10: #{conv2d_subsampling4_forward.1} parent=5 // pred_check_branch
      %204 = sbr.rel (%p201) target = $region12
    $region11: #{conv2d_subsampling4_forward.1} parent=5 // pred_region
      %s205 = ssub.s32 %s13, 1
      // Predicated region
      $region13: #{conv2d_subsampling4_forward.1} parent=11 // pred_check
        %p206 = pneg %p60
      $region14: #{conv2d_subsampling4_forward.1} parent=11 // pred_check_branch
        %208 = sbr.rel (%p206) target = $region16
      $region15: #{conv2d_subsampling4_forward.1} parent=11 // pred_region
        _
      $region16: #{conv2d_subsampling4_forward.1} parent=11 // pred_fallthru
        _
      // Predicated region
      $region17: #{conv2d_subsampling4_forward.1} parent=11 // pred_check
        %p209 = pneg %p81
      $region18: #{conv2d_subsampling4_forward.1} parent=11 // pred_check_branch
        %211 = sbr.rel (%p209) target = $region20
      $region19: #{conv2d_subsampling4_forward.1} parent=11 // pred_region
        _
      $region20: #{conv2d_subsampling4_forward.1} parent=11 // pred_fallthru
        _
      // Predicated region
      $region21: #{conv2d_subsampling4_forward.1} parent=11 // pred_check
        %p212 = pneg %p102
      $region22: #{conv2d_subsampling4_forward.1} parent=11 // pred_check_branch
        %214 = sbr.rel (%p212) target = $region24
      $region23: #{conv2d_subsampling4_forward.1} parent=11 // pred_region
        _
      $region24: #{conv2d_subsampling4_forward.1} parent=11 // pred_fallthru
        _
      // Predicated region
      $region25: #{conv2d_subsampling4_forward.1} parent=11 // pred_check
        %p215 = pneg %p123
      $region26: #{conv2d_subsampling4_forward.1} parent=11 // pred_check_branch
        %217 = sbr.rel (%p215) target = $region28
      $region27: #{conv2d_subsampling4_forward.1} parent=11 // pred_region
        _
      $region28: #{conv2d_subsampling4_forward.1} parent=11 // pred_fallthru
        _
      // Predicated region
      $region29: #{conv2d_subsampling4_forward.1} parent=11 // pred_check
        %p218 = pneg %p144
      $region30: #{conv2d_subsampling4_forward.1} parent=11 // pred_check_branch
        %220 = sbr.rel (%p218) target = $region32
      $region31: #{conv2d_subsampling4_forward.1} parent=11 // pred_region
        _
      $region32: #{conv2d_subsampling4_forward.1} parent=11 // pred_fallthru
        _
      // Predicated region
      $region33: #{conv2d_subsampling4_forward.1} parent=11 // pred_check
        %p221 = pneg %p165
      $region34: #{conv2d_subsampling4_forward.1} parent=11 // pred_check_branch
        %223 = sbr.rel (%p221) target = $region36
      $region35: #{conv2d_subsampling4_forward.1} parent=11 // pred_region
        _
      $region36: #{conv2d_subsampling4_forward.1} parent=11 // pred_fallthru
        _
    $region12: #{conv2d_subsampling4_forward.1} parent=5 // pred_fallthru
      _
    %p224 = scmp.lt.s32.totalorder %s13, 2
    // Predicated region
    $region37: #{conv2d_subsampling4_forward.1} parent=5 // pred_check
      %p225 = pneg %p224
    $region38: #{conv2d_subsampling4_forward.1} parent=5 // pred_check_branch
      %227 = sbr.rel (%p225) target = $region40
    $region39: #{conv2d_subsampling4_forward.1} parent=5 // pred_region
      // Predicated region
      $region41: #{conv2d_subsampling4_forward.1} parent=39 // pred_check
        %p228 = pneg %p33
      $region42: #{conv2d_subsampling4_forward.1} parent=39 // pred_check_branch
        %230 = sbr.rel (%p228) target = $region44
      $region43: #{conv2d_subsampling4_forward.1} parent=39 // pred_region
        %p231 = scmp.lt.s32.totalorder %s13, 1
        %s232 = scalar_select %p231, %s13, 1
        %s233 = smul.addr %s232, 4
        %s234 = scalar_lea.vmem %s0, %s233
      $region44: #{conv2d_subsampling4_forward.1} parent=39 // pred_fallthru
        _
    $region40: #{conv2d_subsampling4_forward.1} parent=5 // pred_fallthru
      _
    %p235 = scmp.le.s32.totalorder 1, %s13
    %p236 = scmp.lt.s32.totalorder %s13, 3
    %p237 = pnand %p235, %p236
    %p238 = pneg %p237
    // Predicated region
    $region45: #{conv2d_subsampling4_forward.1} parent=5 // pred_check
      _
    $region46: #{conv2d_subsampling4_forward.1} parent=5 // pred_check_branch
      %240 = sbr.rel (%p237) target = $region48
    $region47: #{conv2d_subsampling4_forward.1} parent=5 // pred_region
      %s241 = ssub.s32 %s13, 1
      %p242 = scmp.lt.s32.totalorder %s18, 1
      %s243 = scalar_select %p242, %s18, 1
      %s244 = smul.addr %s243, 4
      %s245 = scalar_lea.vmem %s0, %s244
      %p246 = pneg %p39
      %p247 = pneg %p36
      %p248 = pneg %p60
      %p249 = pneg %p57
      %p250 = pneg %p81
      %p251 = pneg %p78
      %p252 = pneg %p102
      %p253 = pneg %p99
      %p254 = pneg %p123
      %p255 = pneg %p120
      %p256 = pneg %p144
      %p257 = pneg %p141
      %p258 = pneg %p165
      %p259 = pneg %p162
      %p260 = pneg %p191
      %p261 = pneg %p188
      %p262 = scmp.lt.s32.totalorder %s18, 1
      %s263 = scalar_select %p262, %s18, 1
      %s264 = smul.addr %s263, 4
      %s265 = scalar_lea.vmem %s7, %s264
      %p266 = scmp.lt.s32.totalorder %s18, 1
      %s267 = scalar_select %p266, %s18, 1
      %s268 = smul.addr %s267, 4
      %s269 = scalar_lea.vmem %s0, %s268
      %p270 = scmp.lt.s32.totalorder %s18, 1
      %s271 = scalar_select %p270, %s18, 1
      %s272 = smul.addr %s271, 4
      %s273 = scalar_lea.vmem %s7, %s272
      %v275 = vld [vmem:[%s1] sm:$0xf]
      %v276 = vld [vmem:[%s1 + $0x4] sm:$0x1]
      %v277 = vld [vmem:[%s2] sm:$0x1]
      %v279 = vlaneseq
      %v280 = vshrl.u32 %v279, 7
      %v281 = vsub.s32 0, %v280
      %v282 = vrot.slane %v277, %v281
      %v284 = vld [vmem:[%s269] sm:$0xf]
      %v287 = vunpack.c.l.b16 %v275
      %v288 = vunpack.c.l.b16 %v276
      %v289 = vpack.c.b16 %v288, %v287
      %vm290 = vcmask 72704
      %v292 = vsel %vm290, %v284, 0
      %vm294 = vcmask 1043456
      %vm295 = vcmask 1044480
      %v296 = vsel %vm294, 4294967295, 65535
      %v297 = vsel %vm295, %v296, 0
      %v299 = vand.u32 %v289, %v297
      %301 = vmatprep.subr.bf16.mxu0 0
      %302 = vmatpush1.bf16.msra.mxu0 %v299
      %303 = vmatprep.subr.bf16.mxu0 0
      %304 = vmatpush1.bf16.msra.mxu0 0
      %305 = vmatprep.subr.bf16.mxu0 0
      %306 = vmatpush1.bf16.msra.mxu0 0
      %307 = vmatprep.subr.bf16.mxu0 0
      %308 = vmatpush1.bf16.msra.mxu0 0
      %309 = vmatprep.subr.bf16.mxu0 0
      %310 = vmatpush1.bf16.msra.mxu0 0
      %311 = vmatprep.subr.bf16.mxu0 0
      %312 = vmatpush1.bf16.msra.mxu0 0
      %313 = vmatprep.subr.bf16.mxu0 0
      %314 = vmatpush1.bf16.msra.mxu0 0
      %315 = vmatprep.subr.bf16.mxu0 0
      %316 = vmatpush1.bf16.msra.mxu0 0
      %317 = vmatprep.subr.bf16.mxu0 0
      %318 = vmatpush1.bf16.msra.mxu0 0
      %319 = vmatprep.subr.bf16.mxu0 0
      %320 = vmatpush1.bf16.msra.mxu0 0
      %321 = vmatprep.subr.bf16.mxu0 0
      %322 = vmatpush1.bf16.msra.mxu0 0
      %323 = vmatprep.subr.bf16.mxu0 0
      %324 = vmatpush1.bf16.msra.mxu0 0
      %325 = vmatprep.subr.bf16.mxu0 0
      %326 = vmatpush1.bf16.msra.mxu0 0
      %327 = vmatprep.subr.bf16.mxu0 0
      %328 = vmatpush1.bf16.msra.mxu0 0
      %329 = vmatprep.subr.bf16.mxu0 0
      %330 = vmatpush1.bf16.msra.mxu0 0
      %331 = vmatprep.subr.bf16.mxu0 0
      %332 = vmatpush1.bf16.msra.mxu0 0
      %333 = vmatprep.mubr.bf16.mxu0 0
      %334 = vmatmul.mubr.bf16.gmra.mrb[0].mxu0 %v292
      %v335 = vpop.f32.mrb[0].mxu0
      %v336 = vadd.f32 %v282, %v335
      %v337 = vpop.f32.mrb[0].mxu0
      %v338 = vpop.f32.mrb[0].mxu0
      %v339 = vpop.f32.mrb[0].mxu0
      %340 = vdwg.mxu0
      %v341 = vmax.f32 %v336, 0.0
      %v342 = vpack.c.bf16 %v341, %v341
      %vm343 = vcmask 257024
      %344 = vst.msk [vmem:[#allocation2] sm:$0xf] %vm343, %v342
      %v345 = vld [vmem:[%s269] sm:$0xf]
      %v347 = vunpack.c.l.b16 %v345
      %v348 = vpack.c.b16 %v347, %v347
      %349 = vrot.lane.b32.xlu0 %v348, 119
      %v350 = vpop.permute.xlu0 %349
      %v352 = vsel %vm290, %v350, 0
      %354 = vmatprep.subr.bf16.mxu0 0
      %355 = vmatpush1.bf16.msra.mxu0 %v299
      %356 = vmatprep.subr.bf16.mxu0 0
      %357 = vmatpush1.bf16.msra.mxu0 0
      %358 = vmatprep.subr.bf16.mxu0 0
      %359 = vmatpush1.bf16.msra.mxu0 0
      %360 = vmatprep.subr.bf16.mxu0 0
      %361 = vmatpush1.bf16.msra.mxu0 0
      %362 = vmatprep.subr.bf16.mxu0 0
      %363 = vmatpush1.bf16.msra.mxu0 0
      %364 = vmatprep.subr.bf16.mxu0 0
      %365 = vmatpush1.bf16.msra.mxu0 0
      %366 = vmatprep.subr.bf16.mxu0 0
      %367 = vmatpush1.bf16.msra.mxu0 0
      %368 = vmatprep.subr.bf16.mxu0 0
      %369 = vmatpush1.bf16.msra.mxu0 0
      %370 = vmatprep.subr.bf16.mxu0 0
      %371 = vmatpush1.bf16.msra.mxu0 0
      %372 = vmatprep.subr.bf16.mxu0 0
      %373 = vmatpush1.bf16.msra.mxu0 0
      %374 = vmatprep.subr.bf16.mxu0 0
      %375 = vmatpush1.bf16.msra.mxu0 0
      %376 = vmatprep.subr.bf16.mxu0 0
      %377 = vmatpush1.bf16.msra.mxu0 0
      %378 = vmatprep.subr.bf16.mxu0 0
      %379 = vmatpush1.bf16.msra.mxu0 0
      %380 = vmatprep.subr.bf16.mxu0 0
      %381 = vmatpush1.bf16.msra.mxu0 0
      %382 = vmatprep.subr.bf16.mxu0 0
      %383 = vmatpush1.bf16.msra.mxu0 0
      %384 = vmatprep.subr.bf16.mxu0 0
      %385 = vmatpush1.bf16.msra.mxu0 0
      %386 = vmatprep.mubr.bf16.mxu0 0
      %387 = vmatmul.mubr.bf16.gmra.mrb[0].mxu0 %v352
      %v388 = vpop.f32.mrb[0].mxu0
      %v389 = vadd.f32 %v282, %v388
      %v390 = vpop.f32.mrb[0].mxu0
      %v391 = vpop.f32.mrb[0].mxu0
      %v392 = vpop.f32.mrb[0].mxu0
      %393 = vdwg.mxu0
      %v394 = vmax.f32 %v389, 0.0
      %v395 = vpack.c.bf16 %v394, %v394
      %v397 = vunpack.c.l.b16 %v395
      %v398 = vpack.c.b16 %v397, %v397
      %399 = vrot.lane.b32.xlu0 %v398, 32
      %v400 = vpop.permute.xlu0 %399
      %vm402 = vcmask 519424
      %403 = vst.msk [vmem:[#allocation2] sm:$0xf] %vm402, %v400
      %v404 = vld [vmem:[%s269] sm:$0xf]
      %v406 = vunpack.c.l.b16 %v404
      %v407 = vpack.c.b16 %v406, %v406
      %408 = vrot.lane.b32.xlu0 %v407, 110
      %v409 = vpop.permute.xlu0 %408
      %v411 = vsel %vm290, %v409, 0
      %413 = vmatprep.subr.bf16.mxu0 0
      %414 = vmatpush1.bf16.msra.mxu0 %v299
      %415 = vmatprep.subr.bf16.mxu0 0
      %416 = vmatpush1.bf16.msra.mxu0 0
      %417 = vmatprep.subr.bf16.mxu0 0
      %418 = vmatpush1.bf16.msra.mxu0 0
      %419 = vmatprep.subr.bf16.mxu0 0
      %420 = vmatpush1.bf16.msra.mxu0 0
      %421 = vmatprep.subr.bf16.mxu0 0
      %422 = vmatpush1.bf16.msra.mxu0 0
      %423 = vmatprep.subr.bf16.mxu0 0
      %424 = vmatpush1.bf16.msra.mxu0 0
      %425 = vmatprep.subr.bf16.mxu0 0
      %426 = vmatpush1.bf16.msra.mxu0 0
      %427 = vmatprep.subr.bf16.mxu0 0
      %428 = vmatpush1.bf16.msra.mxu0 0
      %429 = vmatprep.subr.bf16.mxu0 0
      %430 = vmatpush1.bf16.msra.mxu0 0
      %431 = vmatprep.subr.bf16.mxu0 0
      %432 = vmatpush1.bf16.msra.mxu0 0
      %433 = vmatprep.subr.bf16.mxu0 0
      %434 = vmatpush1.bf16.msra.mxu0 0
      %435 = vmatprep.subr.bf16.mxu0 0
      %436 = vmatpush1.bf16.msra.mxu0 0
      %437 = vmatprep.subr.bf16.mxu0 0
      %438 = vmatpush1.bf16.msra.mxu0 0
      %439 = vmatprep.subr.bf16.mxu0 0
      %440 = vmatpush1.bf16.msra.mxu0 0
      %441 = vmatprep.subr.bf16.mxu0 0
      %442 = vmatpush1.bf16.msra.mxu0 0
      %443 = vmatprep.subr.bf16.mxu0 0
      %444 = vmatpush1.bf16.msra.mxu0 0
      %445 = vmatprep.mubr.bf16.mxu0 0
      %446 = vmatmul.mubr.bf16.gmra.mrb[0].mxu0 %v411
      %v447 = vpop.f32.mrb[0].mxu0
      %v448 = vadd.f32 %v282, %v447
      %v449 = vpop.f32.mrb[0].mxu0
      %v450 = vpop.f32.mrb[0].mxu0
      %v451 = vpop.f32.mrb[0].mxu0
      %452 = vdwg.mxu0
      %v453 = vmax.f32 %v448, 0.0
      %v454 = vpack.c.bf16 %v453, %v453
      %v456 = vunpack.c.l.b16 %v454
      %v457 = vpack.c.b16 %v456, %v456
      %458 = vrot.lane.b32.xlu0 %v457, 64
      %v459 = vpop.permute.xlu0 %458
      %vm461 = vcmask 781824
      %462 = vst.msk [vmem:[#allocation2] sm:$0xf] %vm461, %v459
      %v463 = vld [vmem:[%s269] sm:$0xf]
      %v465 = vunpack.c.l.b16 %v463
      %v466 = vpack.c.b16 %v465, %v465
      %467 = vrot.lane.b32.xlu0 %v466, 101
      %v468 = vpop.permute.xlu0 %467
      %v470 = vsel %vm290, %v468, 0
      %472 = vmatprep.subr.bf16.mxu0 0
      %473 = vmatpush1.bf16.msra.mxu0 %v299
      %474 = vmatprep.subr.bf16.mxu0 0
      %475 = vmatpush1.bf16.msra.mxu0 0
      %476 = vmatprep.subr.bf16.mxu0 0
      %477 = vmatpush1.bf16.msra.mxu0 0
      %478 = vmatprep.subr.bf16.mxu0 0
      %479 = vmatpush1.bf16.msra.mxu0 0
      %480 = vmatprep.subr.bf16.mxu0 0
      %481 = vmatpush1.bf16.msra.mxu0 0
      %482 = vmatprep.subr.bf16.mxu0 0
      %483 = vmatpush1.bf16.msra.mxu0 0
      %484 = vmatprep.subr.bf16.mxu0 0
      %485 = vmatpush1.bf16.msra.mxu0 0
      %486 = vmatprep.subr.bf16.mxu0 0
      %487 = vmatpush1.bf16.msra.mxu0 0
      %488 = vmatprep.subr.bf16.mxu0 0
      %489 = vmatpush1.bf16.msra.mxu0 0
      %490 = vmatprep.subr.bf16.mxu0 0
      %491 = vmatpush1.bf16.msra.mxu0 0
      %492 = vmatprep.subr.bf16.mxu0 0
      %493 = vmatpush1.bf16.msra.mxu0 0
      %494 = vmatprep.subr.bf16.mxu0 0
      %495 = vmatpush1.bf16.msra.mxu0 0
      %496 = vmatprep.subr.bf16.mxu0 0
      %497 = vmatpush1.bf16.msra.mxu0 0
      %498 = vmatprep.subr.bf16.mxu0 0
      %499 = vmatpush1.bf16.msra.mxu0 0
      %500 = vmatprep.subr.bf16.mxu0 0
      %501 = vmatpush1.bf16.msra.mxu0 0
      %502 = vmatprep.subr.bf16.mxu0 0
      %503 = vmatpush1.bf16.msra.mxu0 0
      %504 = vmatprep.mubr.bf16.mxu0 0
      %505 = vmatmul.mubr.bf16.gmra.mrb[0].mxu0 %v470
      %v506 = vpop.f32.mrb[0].mxu0
      %v507 = vadd.f32 %v282, %v506
      %v508 = vpop.f32.mrb[0].mxu0
      %v509 = vpop.f32.mrb[0].mxu0
      %v510 = vpop.f32.mrb[0].mxu0
      %511 = vdwg.mxu0
      %v512 = vmax.f32 %v507, 0.0
      %v513 = vpack.c.bf16 %v512, %v512
      %v515 = vunpack.c.l.b16 %v513
      %v516 = vpack.c.b16 %v515, %v515
      %517 = vrot.lane.b32.xlu0 %v516, 96
      %v518 = vpop.permute.xlu0 %517
      %vm520 = vcmask 1044224
      %521 = vst.msk [vmem:[#allocation2] sm:$0xf] %vm520, %v518
      %v522 = vld [vmem:[%s269] sm:$0xf]
      %v524 = vunpack.c.l.b16 %v522
      %v525 = vpack.c.b16 %v524, %v524
      %526 = vrot.lane.b32.xlu0 %v525, 92
      %v527 = vpop.permute.xlu0 %526
      %v529 = vsel %vm290, %v527, 0
      %531 = vmatprep.subr.bf16.mxu0 0
      %532 = vmatpush1.bf16.msra.mxu0 %v299
      %533 = vmatprep.subr.bf16.mxu0 0
      %534 = vmatpush1.bf16.msra.mxu0 0
      %535 = vmatprep.subr.bf16.mxu0 0
      %536 = vmatpush1.bf16.msra.mxu0 0
      %537 = vmatprep.subr.bf16.mxu0 0
      %538 = vmatpush1.bf16.msra.mxu0 0
      %539 = vmatprep.subr.bf16.mxu0 0
      %540 = vmatpush1.bf16.msra.mxu0 0
      %541 = vmatprep.subr.bf16.mxu0 0
      %542 = vmatpush1.bf16.msra.mxu0 0
      %543 = vmatprep.subr.bf16.mxu0 0
      %544 = vmatpush1.bf16.msra.mxu0 0
      %545 = vmatprep.subr.bf16.mxu0 0
      %546 = vmatpush1.bf16.msra.mxu0 0
      %547 = vmatprep.subr.bf16.mxu0 0
      %548 = vmatpush1.bf16.msra.mxu0 0
      %549 = vmatprep.subr.bf16.mxu0 0
      %550 = vmatpush1.bf16.msra.mxu0 0
      %551 = vmatprep.subr.bf16.mxu0 0
      %552 = vmatpush1.bf16.msra.mxu0 0
      %553 = vmatprep.subr.bf16.mxu0 0
      %554 = vmatpush1.bf16.msra.mxu0 0
      %555 = vmatprep.subr.bf16.mxu0 0
      %556 = vmatpush1.bf16.msra.mxu0 0
      %557 = vmatprep.subr.bf16.mxu0 0
      %558 = vmatpush1.bf16.msra.mxu0 0
      %559 = vmatprep.subr.bf16.mxu0 0
      %560 = vmatpush1.bf16.msra.mxu0 0
      %561 = vmatprep.subr.bf16.mxu0 0
      %562 = vmatpush1.bf16.msra.mxu0 0
      %563 = vmatprep.mubr.bf16.mxu0 0
      %564 = vmatmul.mubr.bf16.gmra.mrb[0].mxu0 %v529
      %v565 = vpop.f32.mrb[0].mxu0
      %v566 = vadd.f32 %v282, %v565
      %v567 = vpop.f32.mrb[0].mxu0
      %v568 = vpop.f32.mrb[0].mxu0
      %v569 = vpop.f32.mrb[0].mxu0
      %570 = vdwg.mxu0
      %v571 = vmax.f32 %v566, 0.0
      %v572 = vpack.c.bf16 %v571, %v571
      %573 = vst.msk [vmem:[#allocation2 + $0x4] sm:$0xf] %vm343, %v572
      %v574 = vld [vmem:[%s269] sm:$0xf]
      %v576 = vunpack.c.l.b16 %v574
      %v577 = vpack.c.b16 %v576, %v576
      %578 = vrot.lane.b32.xlu0 %v577, 83
      %v579 = vpop.permute.xlu0 %578
      %v581 = vsel %vm290, %v579, 0
      %583 = vmatprep.subr.bf16.mxu0 0
      %584 = vmatpush1.bf16.msra.mxu0 %v299
      %585 = vmatprep.subr.bf16.mxu0 0
      %586 = vmatpush1.bf16.msra.mxu0 0
      %587 = vmatprep.subr.bf16.mxu0 0
      %588 = vmatpush1.bf16.msra.mxu0 0
      %589 = vmatprep.subr.bf16.mxu0 0
      %590 = vmatpush1.bf16.msra.mxu0 0
      %591 = vmatprep.subr.bf16.mxu0 0
      %592 = vmatpush1.bf16.msra.mxu0 0
      %593 = vmatprep.subr.bf16.mxu0 0
      %594 = vmatpush1.bf16.msra.mxu0 0
      %595 = vmatprep.subr.bf16.mxu0 0
      %596 = vmatpush1.bf16.msra.mxu0 0
      %597 = vmatprep.subr.bf16.mxu0 0
      %598 = vmatpush1.bf16.msra.mxu0 0
      %599 = vmatprep.subr.bf16.mxu0 0
      %600 = vmatpush1.bf16.msra.mxu0 0
      %601 = vmatprep.subr.bf16.mxu0 0
      %602 = vmatpush1.bf16.msra.mxu0 0
      %603 = vmatprep.subr.bf16.mxu0 0
      %604 = vmatpush1.bf16.msra.mxu0 0
      %605 = vmatprep.subr.bf16.mxu0 0
      %606 = vmatpush1.bf16.msra.mxu0 0
      %607 = vmatprep.subr.bf16.mxu0 0
      %608 = vmatpush1.bf16.msra.mxu0 0
      %609 = vmatprep.subr.bf16.mxu0 0
      %610 = vmatpush1.bf16.msra.mxu0 0
      %611 = vmatprep.subr.bf16.mxu0 0
      %612 = vmatpush1.bf16.msra.mxu0 0
      %613 = vmatprep.subr.bf16.mxu0 0
      %614 = vmatpush1.bf16.msra.mxu0 0
      %615 = vmatprep.mubr.bf16.mxu0 0
      %616 = vmatmul.mubr.bf16.gmra.mrb[0].mxu0 %v581
      %v617 = vpop.f32.mrb[0].mxu0
      %v618 = vadd.f32 %v282, %v617
      %v619 = vpop.f32.mrb[0].mxu0
      %v620 = vpop.f32.mrb[0].mxu0
      %v621 = vpop.f32.mrb[0].mxu0
      %622 = vdwg.mxu0
      %v623 = vmax.f32 %v618, 0.0
      %v624 = vpack.c.bf16 %v623, %v623
      %v626 = vunpack.c.l.b16 %v624
      %v627 = vpack.c.b16 %v626, %v626
      %628 = vrot.lane.b32.xlu0 %v627, 32
      %v629 = vpop.permute.xlu0 %628
      %631 = vst.msk [vmem:[#allocation2 + $0x4] sm:$0xf] %vm402, %v629
      %v632 = vld [vmem:[%s269] sm:$0xf]
      %v634 = vunpack.c.l.b16 %v632
      %v635 = vpack.c.b16 %v634, %v634
      %636 = vrot.lane.b32.xlu0 %v635, 74
      %v637 = vpop.permute.xlu0 %636
      %v639 = vsel %vm290, %v637, 0
      %641 = vmatprep.subr.bf16.mxu0 0
      %642 = vmatpush1.bf16.msra.mxu0 %v299
      %643 = vmatprep.subr.bf16.mxu0 0
      %644 = vmatpush1.bf16.msra.mxu0 0
      %645 = vmatprep.subr.bf16.mxu0 0
      %646 = vmatpush1.bf16.msra.mxu0 0
      %647 = vmatprep.subr.bf16.mxu0 0
      %648 = vmatpush1.bf16.msra.mxu0 0
      %649 = vmatprep.subr.bf16.mxu0 0
      %650 = vmatpush1.bf16.msra.mxu0 0
      %651 = vmatprep.subr.bf16.mxu0 0
      %652 = vmatpush1.bf16.msra.mxu0 0
      %653 = vmatprep.subr.bf16.mxu0 0
      %654 = vmatpush1.bf16.msra.mxu0 0
      %655 = vmatprep.subr.bf16.mxu0 0
      %656 = vmatpush1.bf16.msra.mxu0 0
      %657 = vmatprep.subr.bf16.mxu0 0
      %658 = vmatpush1.bf16.msra.mxu0 0
      %659 = vmatprep.subr.bf16.mxu0 0
      %660 = vmatpush1.bf16.msra.mxu0 0
      %661 = vmatprep.subr.bf16.mxu0 0
      %662 = vmatpush1.bf16.msra.mxu0 0
      %663 = vmatprep.subr.bf16.mxu0 0
      %664 = vmatpush1.bf16.msra.mxu0 0
      %665 = vmatprep.subr.bf16.mxu0 0
      %666 = vmatpush1.bf16.msra.mxu0 0
      %667 = vmatprep.subr.bf16.mxu0 0
      %668 = vmatpush1.bf16.msra.mxu0 0
      %669 = vmatprep.subr.bf16.mxu0 0
      %670 = vmatpush1.bf16.msra.mxu0 0
      %671 = vmatprep.subr.bf16.mxu0 0
      %672 = vmatpush1.bf16.msra.mxu0 0
      %673 = vmatprep.mubr.bf16.mxu0 0
      %674 = vmatmul.mubr.bf16.gmra.mrb[0].mxu0 %v639
      %v675 = vpop.f32.mrb[0].mxu0
      %v676 = vadd.f32 %v282, %v675
      %v677 = vpop.f32.mrb[0].mxu0
      %v678 = vpop.f32.mrb[0].mxu0
      %v679 = vpop.f32.mrb[0].mxu0
      %680 = vdwg.mxu0
      %v681 = vmax.f32 %v676, 0.0
      %v682 = vpack.c.bf16 %v681, %v681
      %v684 = vunpack.c.l.b16 %v682
      %v685 = vpack.c.b16 %v684, %v684
      %686 = vrot.lane.b32.xlu0 %v685, 64
      %v687 = vpop.permute.xlu0 %686
      %689 = vst.msk [vmem:[#allocation2 + $0x4] sm:$0xf] %vm461, %v687
      %v690 = vld [vmem:[%s4] sm:$0x1]
      %v692 = vlaneseq
      %v693 = vshrl.u32 %v692, 7
      %v694 = vsub.s32 0, %v693
      %v695 = vrot.slane %v690, %v694
      %v697 = vld [vmem:[#allocation2] sm:$0x3]
      %v698 = vld [vmem:[%s3] sm:$0xf]
      %v699 = vld [vmem:[%s3 + $0x4] sm:$0xf]
      %v700 = vld [vmem:[%s3 + $0x8] sm:$0xf]
      %v701 = vld [vmem:[%s3 + $0xc] sm:$0xf]
      %v702 = vld [vmem:[%s3 + $0x10] sm:$0xf]
      %v703 = vld [vmem:[%s3 + $0x14] sm:$0xf]
      %v704 = vld [vmem:[%s3 + $0x18] sm:$0xf]
      %v705 = vld [vmem:[%s3 + $0x1c] sm:$0xf]
      %v706 = vld [vmem:[%s3 + $0x20] sm:$0xf]
      %v707 = vld [vmem:[%s3 + $0x24] sm:$0xf]
      %v708 = vld [vmem:[%s3 + $0x28] sm:$0xf]
      %v709 = vld [vmem:[%s3 + $0x2c] sm:$0xf]
      %v710 = vld [vmem:[#allocation2] sm:$0xc]
      %s711 = scalar_lea.vmem %s3, 48
      %v712 = vld [vmem:[%s711] sm:$0xf]
      %v713 = vld [vmem:[%s711 + $0x4] sm:$0xf]
      %v714 = vld [vmem:[%s711 + $0x8] sm:$0xf]
      %v715 = vld [vmem:[%s711 + $0xc] sm:$0xf]
      %v716 = vld [vmem:[%s711 + $0x10] sm:$0xf]
      %v717 = vld [vmem:[%s711 + $0x14] sm:$0xf]
      %v718 = vld [vmem:[%s711 + $0x18] sm:$0xf]
      %v719 = vld [vmem:[%s711 + $0x1c] sm:$0xf]
      %v720 = vld [vmem:[%s711 + $0x20] sm:$0xf]
      %v721 = vld [vmem:[%s711 + $0x24] sm:$0xf]
      %v722 = vld [vmem:[%s711 + $0x28] sm:$0xf]
      %v723 = vld [vmem:[%s711 + $0x2c] sm:$0xf]
      %v725 = vunpack.c.l.b16 %v710
      %v726 = vpack.c.b16 %v725, %v725
      %v727 = vrot.slane %v726, 2
      %v740 = vunpack.c.l.b16 %v712
      %v741 = vunpack.c.l.b16 %v713
      %v742 = vunpack.c.l.b16 %v714
      %v743 = vunpack.c.l.b16 %v715
      %v744 = vunpack.c.l.b16 %v716
      %v745 = vunpack.c.l.b16 %v717
      %v746 = vunpack.c.l.b16 %v718
      %v747 = vunpack.c.l.b16 %v719
      %v748 = vunpack.c.l.b16 %v720
      %v749 = vunpack.c.l.b16 %v721
      %v750 = vunpack.c.l.b16 %v722
      %v751 = vunpack.c.l.b16 %v723
      %v752 = vpack.c.b16 %v741, %v740
      %v753 = vpack.c.b16 %v743, %v742
      %v754 = vpack.c.b16 %v745, %v744
      %v755 = vpack.c.b16 %v747, %v746
      %v756 = vpack.c.b16 %v749, %v748
      %v757 = vpack.c.b16 %v751, %v750
      %vm764 = vcmask 785408
      %v766 = vsel %vm764, %v727, 0
      %768 = vmatprep.subr.bf16.mxu0 0
      %769 = vmatpush1.bf16.msra.mxu0 %v752
      %770 = vmatprep.subr.bf16.mxu0 0
      %771 = vmatpush1.bf16.msra.mxu0 %v753
      %772 = vmatprep.subr.bf16.mxu0 0
      %773 = vmatpush1.bf16.msra.mxu0 %v754
      %774 = vmatprep.subr.bf16.mxu0 0
      %775 = vmatpush1.bf16.msra.mxu0 %v755
      %776 = vmatprep.subr.bf16.mxu0 0
      %777 = vmatpush1.bf16.msra.mxu0 %v756
      %778 = vmatprep.subr.bf16.mxu0 0
      %779 = vmatpush1.bf16.msra.mxu0 %v757
      %780 = vmatprep.subr.bf16.mxu0 0
      %781 = vmatpush1.bf16.msra.mxu0 0
      %782 = vmatprep.subr.bf16.mxu0 0
      %783 = vmatpush1.bf16.msra.mxu0 0
      %784 = vmatprep.subr.bf16.mxu0 0
      %785 = vmatpush1.bf16.msra.mxu0 0
      %786 = vmatprep.subr.bf16.mxu0 0
      %787 = vmatpush1.bf16.msra.mxu0 0
      %788 = vmatprep.subr.bf16.mxu0 0
      %789 = vmatpush1.bf16.msra.mxu0 0
      %790 = vmatprep.subr.bf16.mxu0 0
      %791 = vmatpush1.bf16.msra.mxu0 0
      %792 = vmatprep.subr.bf16.mxu0 0
      %793 = vmatpush1.bf16.msra.mxu0 0
      %794 = vmatprep.subr.bf16.mxu0 0
      %795 = vmatpush1.bf16.msra.mxu0 0
      %796 = vmatprep.subr.bf16.mxu0 0
      %797 = vmatpush1.bf16.msra.mxu0 0
      %798 = vmatprep.subr.bf16.mxu0 0
      %799 = vmatpush1.bf16.msra.mxu0 0
      %800 = vmatprep.mubr.bf16.mxu0 0
      %801 = vmatmul.mubr.bf16.gmra.mrb[0].mxu0 %v766
      %v802 = vpop.f32.mrb[0].mxu0
      %v803 = vadd.f32 0.0, %v802
      %v804 = vpop.f32.mrb[0].mxu0
      %v805 = vpop.f32.mrb[0].mxu0
      %v806 = vpop.f32.mrb[0].mxu0
      %807 = vdwg.mxu0
      %v820 = vunpack.c.l.b16 %v698
      %v821 = vunpack.c.l.b16 %v699
      %v822 = vunpack.c.l.b16 %v700
      %v823 = vunpack.c.l.b16 %v701
      %v824 = vunpack.c.l.b16 %v702
      %v825 = vunpack.c.l.b16 %v703
      %v826 = vunpack.c.l.b16 %v704
      %v827 = vunpack.c.l.b16 %v705
      %v828 = vunpack.c.l.b16 %v706
      %v829 = vunpack.c.l.b16 %v707
      %v830 = vunpack.c.l.b16 %v708
      %v831 = vunpack.c.l.b16 %v709
      %v832 = vpack.c.b16 %v821, %v820
      %v833 = vpack.c.b16 %v823, %v822
      %v834 = vpack.c.b16 %v825, %v824
      %v835 = vpack.c.b16 %v827, %v826
      %v836 = vpack.c.b16 %v829, %v828
      %v837 = vpack.c.b16 %v831, %v830
      %v845 = vsel %vm764, %v697, 0
      %847 = vmatprep.subr.bf16.mxu0 0
      %848 = vmatpush1.bf16.msra.mxu0 %v832
      %849 = vmatprep.subr.bf16.mxu0 0
      %850 = vmatpush1.bf16.msra.mxu0 %v833
      %851 = vmatprep.subr.bf16.mxu0 0
      %852 = vmatpush1.bf16.msra.mxu0 %v834
      %853 = vmatprep.subr.bf16.mxu0 0
      %854 = vmatpush1.bf16.msra.mxu0 %v835
      %855 = vmatprep.subr.bf16.mxu0 0
      %856 = vmatpush1.bf16.msra.mxu0 %v836
      %857 = vmatprep.subr.bf16.mxu0 0
      %858 = vmatpush1.bf16.msra.mxu0 %v837
      %859 = vmatprep.subr.bf16.mxu0 0
      %860 = vmatpush1.bf16.msra.mxu0 0
      %861 = vmatprep.subr.bf16.mxu0 0
      %862 = vmatpush1.bf16.msra.mxu0 0
      %863 = vmatprep.subr.bf16.mxu0 0
      %864 = vmatpush1.bf16.msra.mxu0 0
      %865 = vmatprep.subr.bf16.mxu0 0
      %866 = vmatpush1.bf16.msra.mxu0 0
      %867 = vmatprep.subr.bf16.mxu0 0
      %868 = vmatpush1.bf16.msra.mxu0 0
      %869 = vmatprep.subr.bf16.mxu0 0
      %870 = vmatpush1.bf16.msra.mxu0 0
      %871 = vmatprep.subr.bf16.mxu0 0
      %872 = vmatpush1.bf16.msra.mxu0 0
      %873 = vmatprep.subr.bf16.mxu0 0
      %874 = vmatpush1.bf16.msra.mxu0 0
      %875 = vmatprep.subr.bf16.mxu0 0
      %876 = vmatpush1.bf16.msra.mxu0 0
      %877 = vmatprep.subr.bf16.mxu0 0
      %878 = vmatpush1.bf16.msra.mxu0 0
      %879 = vmatprep.mubr.bf16.mxu0 0
      %880 = vmatmul.mubr.bf16.gmra.mrb[0].mxu0 %v845
      %v881 = vpop.f32.mrb[0].mxu0
      %v882 = vadd.f32 %v803, %v881
      %v883 = vpop.f32.mrb[0].mxu0
      %v884 = vpop.f32.mrb[0].mxu0
      %v885 = vpop.f32.mrb[0].mxu0
      %886 = vdwg.mxu0
      %s887 = scalar_lea.vmem %s3, 96
      %v888 = vld [vmem:[%s887] sm:$0xf]
      %v889 = vld [vmem:[%s887 + $0x4] sm:$0xf]
      %v890 = vld [vmem:[%s887 + $0x8] sm:$0xf]
      %v891 = vld [vmem:[%s887 + $0xc] sm:$0xf]
      %v892 = vld [vmem:[%s887 + $0x10] sm:$0xf]
      %v893 = vld [vmem:[%s887 + $0x14] sm:$0xf]
      %v894 = vld [vmem:[%s887 + $0x18] sm:$0xf]
      %v895 = vld [vmem:[%s887 + $0x1c] sm:$0xf]
      %v896 = vld [vmem:[%s887 + $0x20] sm:$0xf]
      %v897 = vld [vmem:[%s887 + $0x24] sm:$0xf]
      %v898 = vld [vmem:[%s887 + $0x28] sm:$0xf]
      %v899 = vld [vmem:[%s887 + $0x2c] sm:$0xf]
      %v901 = vunpack.c.l.b16 %v697
      %v902 = vpack.c.b16 %v901, %v901
      %v904 = vshrl.u32 %v902, 16
      %v906 = vshll.u32 %v902, 16
      %v908 = vrot.slane %v906, 1
      %v909 = vor.u32 %v904, %v908
      %v922 = vunpack.c.l.b16 %v888
      %v923 = vunpack.c.l.b16 %v889
      %v924 = vunpack.c.l.b16 %v890
      %v925 = vunpack.c.l.b16 %v891
      %v926 = vunpack.c.l.b16 %v892
      %v927 = vunpack.c.l.b16 %v893
      %v928 = vunpack.c.l.b16 %v894
      %v929 = vunpack.c.l.b16 %v895
      %v930 = vunpack.c.l.b16 %v896
      %v931 = vunpack.c.l.b16 %v897
      %v932 = vunpack.c.l.b16 %v898
      %v933 = vunpack.c.l.b16 %v899
      %v934 = vpack.c.b16 %v923, %v922
      %v935 = vpack.c.b16 %v925, %v924
      %v936 = vpack.c.b16 %v927, %v926
      %v937 = vpack.c.b16 %v929, %v928
      %v938 = vpack.c.b16 %v931, %v930
      %v939 = vpack.c.b16 %v933, %v932
      %v947 = vsel %vm764, %v909, 0
      %949 = vmatprep.subr.bf16.mxu0 0
      %950 = vmatpush1.bf16.msra.mxu0 %v934
      %951 = vmatprep.subr.bf16.mxu0 0
      %952 = vmatpush1.bf16.msra.mxu0 %v935
      %953 = vmatprep.subr.bf16.mxu0 0
      %954 = vmatpush1.bf16.msra.mxu0 %v936
      %955 = vmatprep.subr.bf16.mxu0 0
      %956 = vmatpush1.bf16.msra.mxu0 %v937
      %957 = vmatprep.subr.bf16.mxu0 0
      %958 = vmatpush1.bf16.msra.mxu0 %v938
      %959 = vmatprep.subr.bf16.mxu0 0
      %960 = vmatpush1.bf16.msra.mxu0 %v939
      %961 = vmatprep.subr.bf16.mxu0 0
      %962 = vmatpush1.bf16.msra.mxu0 0
      %963 = vmatprep.subr.bf16.mxu0 0
      %964 = vmatpush1.bf16.msra.mxu0 0
      %965 = vmatprep.subr.bf16.mxu0 0
      %966 = vmatpush1.bf16.msra.mxu0 0
      %967 = vmatprep.subr.bf16.mxu0 0
      %968 = vmatpush1.bf16.msra.mxu0 0
      %969 = vmatprep.subr.bf16.mxu0 0
      %970 = vmatpush1.bf16.msra.mxu0 0
      %971 = vmatprep.subr.bf16.mxu0 0
      %972 = vmatpush1.bf16.msra.mxu0 0
      %973 = vmatprep.subr.bf16.mxu0 0
      %974 = vmatpush1.bf16.msra.mxu0 0
      %975 = vmatprep.subr.bf16.mxu0 0
      %976 = vmatpush1.bf16.msra.mxu0 0
      %977 = vmatprep.subr.bf16.mxu0 0
      %978 = vmatpush1.bf16.msra.mxu0 0
      %979 = vmatprep.subr.bf16.mxu0 0
      %980 = vmatpush1.bf16.msra.mxu0 0
      %981 = vmatprep.mubr.bf16.mxu0 0
      %982 = vmatmul.mubr.bf16.gmra.mrb[0].mxu0 %v947
      %v983 = vpop.f32.mrb[0].mxu0
      %v984 = vadd.f32 0.0, %v983
      %v985 = vpop.f32.mrb[0].mxu0
      %v986 = vpop.f32.mrb[0].mxu0
      %v987 = vpop.f32.mrb[0].mxu0
      %988 = vdwg.mxu0
      %v989 = vadd.f32 %v882, %v984
      %v990 = vadd.f32 %v989, %v695
      %v991 = vmax.f32 %v990, 0.0
      %v992 = vpack.c.bf16 %v991, %v991
      %vm993 = vcmask 254976
      %vm994 = vsmask.f32 1280
      %vm995 = vmand %vm993, %vm994
      %v996 = vld [vmem:[#allocation3] sm:$0x3]
      %v997 = vsel %vm995, %v992, %v996
      %998 = vst [vmem:[#allocation3] sm:$0x3] %v997
      %v999 = vld [vmem:[#allocation2] sm:$0x33]
      %v1000 = vld [vmem:[%s3] sm:$0xf]
      %v1001 = vld [vmem:[%s3 + $0x4] sm:$0xf]
      %v1002 = vld [vmem:[%s3 + $0x8] sm:$0xf]
      %v1003 = vld [vmem:[%s3 + $0xc] sm:$0xf]
      %v1004 = vld [vmem:[%s3 + $0x10] sm:$0xf]
      %v1005 = vld [vmem:[%s3 + $0x14] sm:$0xf]
      %v1006 = vld [vmem:[%s3 + $0x18] sm:$0xf]
      %v1007 = vld [vmem:[%s3 + $0x1c] sm:$0xf]
      %v1008 = vld [vmem:[%s3 + $0x20] sm:$0xf]
      %v1009 = vld [vmem:[%s3 + $0x24] sm:$0xf]
      %v1010 = vld [vmem:[%s3 + $0x28] sm:$0xf]
      %v1011 = vld [vmem:[%s3 + $0x2c] sm:$0xf]
      %v1012 = vld [vmem:[#allocation2] sm:$0xcc]
      %v1013 = vld [vmem:[%s711] sm:$0xf]
      %v1014 = vld [vmem:[%s711 + $0x4] sm:$0xf]
      %v1015 = vld [vmem:[%s711 + $0x8] sm:$0xf]
      %v1016 = vld [vmem:[%s711 + $0xc] sm:$0xf]
      %v1017 = vld [vmem:[%s711 + $0x10] sm:$0xf]
      %v1018 = vld [vmem:[%s711 + $0x14] sm:$0xf]
      %v1019 = vld [vmem:[%s711 + $0x18] sm:$0xf]
      %v1020 = vld [vmem:[%s711 + $0x1c] sm:$0xf]
      %v1021 = vld [vmem:[%s711 + $0x20] sm:$0xf]
      %v1022 = vld [vmem:[%s711 + $0x24] sm:$0xf]
      %v1023 = vld [vmem:[%s711 + $0x28] sm:$0xf]
      %v1024 = vld [vmem:[%s711 + $0x2c] sm:$0xf]
      %v1026 = vunpack.c.l.b16 %v1012
      %v1027 = vunpack.c.h.b16 %v1012
      %v1028 = vpack.c.b16 %v1026, %v1026
      %v1029 = vpack.c.b16 %v1027, %v1027
      %v1030 = vrot.slane %v1028, 2
      %v1031 = vrot.slane %v1029, 2
      %1032 = vrot.lane.b32.xlu0 %v1030, 64
      %v1033 = vpop.permute.xlu0 %1032
      %1034 = vrot.lane.b32.xlu0 %v1031, 64
      %v1035 = vpop.permute.xlu0 %1034
      %vm1036 = vcmask 523264
      %v1037 = vsel %vm1036, %v1033, %v1035
      %v1050 = vunpack.c.l.b16 %v1013
      %v1051 = vunpack.c.l.b16 %v1014
      %v1052 = vunpack.c.l.b16 %v1015
      %v1053 = vunpack.c.l.b16 %v1016
      %v1054 = vunpack.c.l.b16 %v1017
      %v1055 = vunpack.c.l.b16 %v1018
      %v1056 = vunpack.c.l.b16 %v1019
      %v1057 = vunpack.c.l.b16 %v1020
      %v1058 = vunpack.c.l.b16 %v1021
      %v1059 = vunpack.c.l.b16 %v1022
      %v1060 = vunpack.c.l.b16 %v1023
      %v1061 = vunpack.c.l.b16 %v1024
      %v1062 = vpack.c.b16 %v1051, %v1050
      %v1063 = vpack.c.b16 %v1053, %v1052
      %v1064 = vpack.c.b16 %v1055, %v1054
      %v1065 = vpack.c.b16 %v1057, %v1056
      %v1066 = vpack.c.b16 %v1059, %v1058
      %v1067 = vpack.c.b16 %v1061, %v1060
      %v1075 = vsel %vm764, %v1037, 0
      %1077 = vmatprep.subr.bf16.mxu0 0
      %1078 = vmatpush1.bf16.msra.mxu0 %v1062
      %1079 = vmatprep.subr.bf16.mxu0 0
      %1080 = vmatpush1.bf16.msra.mxu0 %v1063
      %1081 = vmatprep.subr.bf16.mxu0 0
      %1082 = vmatpush1.bf16.msra.mxu0 %v1064
      %1083 = vmatprep.subr.bf16.mxu0 0
      %1084 = vmatpush1.bf16.msra.mxu0 %v1065
      %1085 = vmatprep.subr.bf16.mxu0 0
      %1086 = vmatpush1.bf16.msra.mxu0 %v1066
      %1087 = vmatprep.subr.bf16.mxu0 0
      %1088 = vmatpush1.bf16.msra.mxu0 %v1067
      %1089 = vmatprep.subr.bf16.mxu0 0
      %1090 = vmatpush1.bf16.msra.mxu0 0
      %1091 = vmatprep.subr.bf16.mxu0 0
      %1092 = vmatpush1.bf16.msra.mxu0 0
      %1093 = vmatprep.subr.bf16.mxu0 0
      %1094 = vmatpush1.bf16.msra.mxu0 0
      %1095 = vmatprep.subr.bf16.mxu0 0
      %1096 = vmatpush1.bf16.msra.mxu0 0
      %1097 = vmatprep.subr.bf16.mxu0 0
      %1098 = vmatpush1.bf16.msra.mxu0 0
      %1099 = vmatprep.subr.bf16.mxu0 0
      %1100 = vmatpush1.bf16.msra.mxu0 0
      %1101 = vmatprep.subr.bf16.mxu0 0
      %1102 = vmatpush1.bf16.msra.mxu0 0
      %1103 = vmatprep.subr.bf16.mxu0 0
      %1104 = vmatpush1.bf16.msra.mxu0 0
      %1105 = vmatprep.subr.bf16.mxu0 0
      %1106 = vmatpush1.bf16.msra.mxu0 0
      %1107 = vmatprep.subr.bf16.mxu0 0
      %1108 = vmatpush1.bf16.msra.mxu0 0
      %1109 = vmatprep.mubr.bf16.mxu0 0
      %1110 = vmatmul.mubr.bf16.gmra.mrb[0].mxu0 %v1075
      %v1111 = vpop.f32.mrb[0].mxu0
      %v1112 = vadd.f32 0.0, %v1111
      %v1113 = vpop.f32.mrb[0].mxu0
      %v1114 = vpop.f32.mrb[0].mxu0
      %v1115 = vpop.f32.mrb[0].mxu0
      %1116 = vdwg.mxu0
      %v1118 = vunpack.c.l.b16 %v999
      %v1119 = vunpack.c.h.b16 %v999
      %v1120 = vpack.c.b16 %v1118, %v1118
      %v1121 = vpack.c.b16 %v1119, %v1119
      %1122 = vrot.lane.b32.xlu0 %v1120, 64
      %v1123 = vpop.permute.xlu0 %1122
      %1124 = vrot.lane.b32.xlu0 %v1121, 64
      %v1125 = vpop.permute.xlu0 %1124
      %v1126 = vsel %vm1036, %v1123, %v1125
      %v1139 = vunpack.c.l.b16 %v1000
      %v1140 = vunpack.c.l.b16 %v1001
      %v1141 = vunpack.c.l.b16 %v1002
      %v1142 = vunpack.c.l.b16 %v1003
      %v1143 = vunpack.c.l.b16 %v1004
      %v1144 = vunpack.c.l.b16 %v1005
      %v1145 = vunpack.c.l.b16 %v1006
      %v1146 = vunpack.c.l.b16 %v1007
      %v1147 = vunpack.c.l.b16 %v1008
      %v1148 = vunpack.c.l.b16 %v1009
      %v1149 = vunpack.c.l.b16 %v1010
      %v1150 = vunpack.c.l.b16 %v1011
      %v1151 = vpack.c.b16 %v1140, %v1139
      %v1152 = vpack.c.b16 %v1142, %v1141
      %v1153 = vpack.c.b16 %v1144, %v1143
      %v1154 = vpack.c.b16 %v1146, %v1145
      %v1155 = vpack.c.b16 %v1148, %v1147
      %v1156 = vpack.c.b16 %v1150, %v1149
      %v1164 = vsel %vm764, %v1126, 0
      %1166 = vmatprep.subr.bf16.mxu0 0
      %1167 = vmatpush1.bf16.msra.mxu0 %v1151
      %1168 = vmatprep.subr.bf16.mxu0 0
      %1169 = vmatpush1.bf16.msra.mxu0 %v1152
      %1170 = vmatprep.subr.bf16.mxu0 0
      %1171 = vmatpush1.bf16.msra.mxu0 %v1153
      %1172 = vmatprep.subr.bf16.mxu0 0
      %1173 = vmatpush1.bf16.msra.mxu0 %v1154
      %1174 = vmatprep.subr.bf16.mxu0 0
      %1175 = vmatpush1.bf16.msra.mxu0 %v1155
      %1176 = vmatprep.subr.bf16.mxu0 0
      %1177 = vmatpush1.bf16.msra.mxu0 %v1156
      %1178 = vmatprep.subr.bf16.mxu0 0
      %1179 = vmatpush1.bf16.msra.mxu0 0
      %1180 = vmatprep.subr.bf16.mxu0 0
      %1181 = vmatpush1.bf16.msra.mxu0 0
      %1182 = vmatprep.subr.bf16.mxu0 0
      %1183 = vmatpush1.bf16.msra.mxu0 0
      %1184 = vmatprep.subr.bf16.mxu0 0
      %1185 = vmatpush1.bf16.msra.mxu0 0
      %1186 = vmatprep.subr.bf16.mxu0 0
      %1187 = vmatpush1.bf16.msra.mxu0 0
      %1188 = vmatprep.subr.bf16.mxu0 0
      %1189 = vmatpush1.bf16.msra.mxu0 0
      %1190 = vmatprep.subr.bf16.mxu0 0
      %1191 = vmatpush1.bf16.msra.mxu0 0
      %1192 = vmatprep.subr.bf16.mxu0 0
      %1193 = vmatpush1.bf16.msra.mxu0 0
      %1194 = vmatprep.subr.bf16.mxu0 0
      %1195 = vmatpush1.bf16.msra.mxu0 0
      %1196 = vmatprep.subr.bf16.mxu0 0
      %1197 = vmatpush1.bf16.msra.mxu0 0
      %1198 = vmatprep.mubr.bf16.mxu0 0
      %1199 = vmatmul.mubr.bf16.gmra.mrb[0].mxu0 %v1164
      %v1200 = vpop.f32.mrb[0].mxu0
      %v1201 = vadd.f32 %v1112, %v1200
      %v1202 = vpop.f32.mrb[0].mxu0
      %v1203 = vpop.f32.mrb[0].mxu0
      %v1204 = vpop.f32.mrb[0].mxu0
      %1205 = vdwg.mxu0
      %v1206 = vld [vmem:[%s887] sm:$0xf]
      %v1207 = vld [vmem:[%s887 + $0x4] sm:$0xf]
      %v1208 = vld [vmem:[%s887 + $0x8] sm:$0xf]
      %v1209 = vld [vmem:[%s887 + $0xc] sm:$0xf]
      %v1210 = vld [vmem:[%s887 + $0x10] sm:$0xf]
      %v1211 = vld [vmem:[%s887 + $0x14] sm:$0xf]
      %v1212 = vld [vmem:[%s887 + $0x18] sm:$0xf]
      %v1213 = vld [vmem:[%s887 + $0x1c] sm:$0xf]
      %v1214 = vld [vmem:[%s887 + $0x20] sm:$0xf]
      %v1215 = vld [vmem:[%s887 + $0x24] sm:$0xf]
      %v1216 = vld [vmem:[%s887 + $0x28] sm:$0xf]
      %v1217 = vld [vmem:[%s887 + $0x2c] sm:$0xf]
      %v1219 = vshrl.u32 %v1120, 16
      %v1221 = vshll.u32 %v1120, 16
      %v1223 = vrot.slane %v1221, 1
      %v1224 = vor.u32 %v1219, %v1223
      %v1226 = vshrl.u32 %v1121, 16
      %v1228 = vshll.u32 %v1121, 16
      %v1230 = vrot.slane %v1228, 1
      %v1231 = vor.u32 %v1226, %v1230
      %1232 = vrot.lane.b32.xlu0 %v1224, 64
      %v1233 = vpop.permute.xlu0 %1232
      %1234 = vrot.lane.b32.xlu0 %v1231, 64
      %v1235 = vpop.permute.xlu0 %1234
      %v1236 = vsel %vm1036, %v1233, %v1235
      %v1249 = vunpack.c.l.b16 %v1206
      %v1250 = vunpack.c.l.b16 %v1207
      %v1251 = vunpack.c.l.b16 %v1208
      %v1252 = vunpack.c.l.b16 %v1209
      %v1253 = vunpack.c.l.b16 %v1210
      %v1254 = vunpack.c.l.b16 %v1211
      %v1255 = vunpack.c.l.b16 %v1212
      %v1256 = vunpack.c.l.b16 %v1213
      %v1257 = vunpack.c.l.b16 %v1214
      %v1258 = vunpack.c.l.b16 %v1215
      %v1259 = vunpack.c.l.b16 %v1216
      %v1260 = vunpack.c.l.b16 %v1217
      %v1261 = vpack.c.b16 %v1250, %v1249
      %v1262 = vpack.c.b16 %v1252, %v1251
      %v1263 = vpack.c.b16 %v1254, %v1253
      %v1264 = vpack.c.b16 %v1256, %v1255
      %v1265 = vpack.c.b16 %v1258, %v1257
      %v1266 = vpack.c.b16 %v1260, %v1259
      %v1274 = vsel %vm764, %v1236, 0
      %1276 = vmatprep.subr.bf16.mxu0 0
      %1277 = vmatpush1.bf16.msra.mxu0 %v1261
      %1278 = vmatprep.subr.bf16.mxu0 0
      %1279 = vmatpush1.bf16.msra.mxu0 %v1262
      %1280 = vmatprep.subr.bf16.mxu0 0
      %1281 = vmatpush1.bf16.msra.mxu0 %v1263
      %1282 = vmatprep.subr.bf16.mxu0 0
      %1283 = vmatpush1.bf16.msra.mxu0 %v1264
      %1284 = vmatprep.subr.bf16.mxu0 0
      %1285 = vmatpush1.bf16.msra.mxu0 %v1265
      %1286 = vmatprep.subr.bf16.mxu0 0
      %1287 = vmatpush1.bf16.msra.mxu0 %v1266
      %1288 = vmatprep.subr.bf16.mxu0 0
      %1289 = vmatpush1.bf16.msra.mxu0 0
      %1290 = vmatprep.subr.bf16.mxu0 0
      %1291 = vmatpush1.bf16.msra.mxu0 0
      %1292 = vmatprep.subr.bf16.mxu0 0
      %1293 = vmatpush1.bf16.msra.mxu0 0
      %1294 = vmatprep.subr.bf16.mxu0 0
      %1295 = vmatpush1.bf16.msra.mxu0 0
      %1296 = vmatprep.subr.bf16.mxu0 0
      %1297 = vmatpush1.bf16.msra.mxu0 0
      %1298 = vmatprep.subr.bf16.mxu0 0
      %1299 = vmatpush1.bf16.msra.mxu0 0
      %1300 = vmatprep.subr.bf16.mxu0 0
      %1301 = vmatpush1.bf16.msra.mxu0 0
      %1302 = vmatprep.subr.bf16.mxu0 0
      %1303 = vmatpush1.bf16.msra.mxu0 0
      %1304 = vmatprep.subr.bf16.mxu0 0
      %1305 = vmatpush1.bf16.msra.mxu0 0
      %1306 = vmatprep.subr.bf16.mxu0 0
      %1307 = vmatpush1.bf16.msra.mxu0 0
      %1308 = vmatprep.mubr.bf16.mxu0 0
      %1309 = vmatmul.mubr.bf16.gmra.mrb[0].mxu0 %v1274
      %v1310 = vpop.f32.mrb[0].mxu0
      %v1311 = vadd.f32 0.0, %v1310
      %v1312 = vpop.f32.mrb[0].mxu0
      %v1313 = vpop.f32.mrb[0].mxu0
      %v1314 = vpop.f32.mrb[0].mxu0
      %1315 = vdwg.mxu0
      %v1316 = vadd.f32 %v1201, %v1311
      %v1317 = vadd.f32 %v1316, %v695
      %v1318 = vmax.f32 %v1317, 0.0
      %v1319 = vpack.c.bf16 %v1318, %v1318
      %v1322 = vunpack.c.l.s4 1983009808
      %v1323 = vunpack.c.0.s8 %v1322
      %v1324 = vlaneseq
      %v1325 = vshrl.u32 %v1324, 7
      %v1326 = vsub.s32 %v1323, %v1325
      %v1327 = vrot.slane %v1319, %v1326
      %1328 = vrot.lane.b32.xlu0 %v1327, 32
      %v1329 = vpop.permute.xlu0 %1328
      %vm1331 = vcmask 517376
      %vm1332 = vmand %vm1331, %vm994
      %v1333 = vld [vmem:[#allocation3] sm:$0x3]
      %v1334 = vsel %vm1332, %v1329, %v1333
      %1335 = vst [vmem:[#allocation3] sm:$0x3] %v1334
      %v1336 = vld [vmem:[#allocation2 + $0x4] sm:$0x3]
      %v1337 = vld [vmem:[%s3] sm:$0xf]
      %v1338 = vld [vmem:[%s3 + $0x4] sm:$0xf]
      %v1339 = vld [vmem:[%s3 + $0x8] sm:$0xf]
      %v1340 = vld [vmem:[%s3 + $0xc] sm:$0xf]
      %v1341 = vld [vmem:[%s3 + $0x10] sm:$0xf]
      %v1342 = vld [vmem:[%s3 + $0x14] sm:$0xf]
      %v1343 = vld [vmem:[%s3 + $0x18] sm:$0xf]
      %v1344 = vld [vmem:[%s3 + $0x1c] sm:$0xf]
      %v1345 = vld [vmem:[%s3 + $0x20] sm:$0xf]
      %v1346 = vld [vmem:[%s3 + $0x24] sm:$0xf]
      %v1347 = vld [vmem:[%s3 + $0x28] sm:$0xf]
      %v1348 = vld [vmem:[%s3 + $0x2c] sm:$0xf]
      %v1349 = vld [vmem:[#allocation2 + $0x4] sm:$0xc]
      %v1350 = vld [vmem:[%s711] sm:$0xf]
      %v1351 = vld [vmem:[%s711 + $0x4] sm:$0xf]
      %v1352 = vld [vmem:[%s711 + $0x8] sm:$0xf]
      %v1353 = vld [vmem:[%s711 + $0xc] sm:$0xf]
      %v1354 = vld [vmem:[%s711 + $0x10] sm:$0xf]
      %v1355 = vld [vmem:[%s711 + $0x14] sm:$0xf]
      %v1356 = vld [vmem:[%s711 + $0x18] sm:$0xf]
      %v1357 = vld [vmem:[%s711 + $0x1c] sm:$0xf]
      %v1358 = vld [vmem:[%s711 + $0x20] sm:$0xf]
      %v1359 = vld [vmem:[%s711 + $0x24] sm:$0xf]
      %v1360 = vld [vmem:[%s711 + $0x28] sm:$0xf]
      %v1361 = vld [vmem:[%s711 + $0x2c] sm:$0xf]
      %v1363 = vunpack.c.l.b16 %v1349
      %v1364 = vpack.c.b16 %v1363, %v1363
      %v1365 = vrot.slane %v1364, 2
      %v1378 = vunpack.c.l.b16 %v1350
      %v1379 = vunpack.c.l.b16 %v1351
      %v1380 = vunpack.c.l.b16 %v1352
      %v1381 = vunpack.c.l.b16 %v1353
      %v1382 = vunpack.c.l.b16 %v1354
      %v1383 = vunpack.c.l.b16 %v1355
      %v1384 = vunpack.c.l.b16 %v1356
      %v1385 = vunpack.c.l.b16 %v1357
      %v1386 = vunpack.c.l.b16 %v1358
      %v1387 = vunpack.c.l.b16 %v1359
      %v1388 = vunpack.c.l.b16 %v1360
      %v1389 = vunpack.c.l.b16 %v1361
      %v1390 = vpack.c.b16 %v1379, %v1378
      %v1391 = vpack.c.b16 %v1381, %v1380
      %v1392 = vpack.c.b16 %v1383, %v1382
      %v1393 = vpack.c.b16 %v1385, %v1384
      %v1394 = vpack.c.b16 %v1387, %v1386
      %v1395 = vpack.c.b16 %v1389, %v1388
      %v1403 = vsel %vm764, %v1365, 0
      %1405 = vmatprep.subr.bf16.mxu0 0
      %1406 = vmatpush1.bf16.msra.mxu0 %v1390
      %1407 = vmatprep.subr.bf16.mxu0 0
      %1408 = vmatpush1.bf16.msra.mxu0 %v1391
      %1409 = vmatprep.subr.bf16.mxu0 0
      %1410 = vmatpush1.bf16.msra.mxu0 %v1392
      %1411 = vmatprep.subr.bf16.mxu0 0
      %1412 = vmatpush1.bf16.msra.mxu0 %v1393
      %1413 = vmatprep.subr.bf16.mxu0 0
      %1414 = vmatpush1.bf16.msra.mxu0 %v1394
      %1415 = vmatprep.subr.bf16.mxu0 0
      %1416 = vmatpush1.bf16.msra.mxu0 %v1395
      %1417 = vmatprep.subr.bf16.mxu0 0
      %1418 = vmatpush1.bf16.msra.mxu0 0
      %1419 = vmatprep.subr.bf16.mxu0 0
      %1420 = vmatpush1.bf16.msra.mxu0 0
      %1421 = vmatprep.subr.bf16.mxu0 0
      %1422 = vmatpush1.bf16.msra.mxu0 0
      %1423 = vmatprep.subr.bf16.mxu0 0
      %1424 = vmatpush1.bf16.msra.mxu0 0
      %1425 = vmatprep.subr.bf16.mxu0 0
      %1426 = vmatpush1.bf16.msra.mxu0 0
      %1427 = vmatprep.subr.bf16.mxu0 0
      %1428 = vmatpush1.bf16.msra.mxu0 0
      %1429 = vmatprep.subr.bf16.mxu0 0
      %1430 = vmatpush1.bf16.msra.mxu0 0
      %1431 = vmatprep.subr.bf16.mxu0 0
      %1432 = vmatpush1.bf16.msra.mxu0 0
      %1433 = vmatprep.subr.bf16.mxu0 0
      %1434 = vmatpush1.bf16.msra.mxu0 0
      %1435 = vmatprep.subr.bf16.mxu0 0
      %1436 = vmatpush1.bf16.msra.mxu0 0
      %1437 = vmatprep.mubr.bf16.mxu0 0
      %1438 = vmatmul.mubr.bf16.gmra.mrb[0].mxu0 %v1403
      %v1439 = vpop.f32.mrb[0].mxu0
      %v1440 = vadd.f32 0.0, %v1439
      %v1441 = vpop.f32.mrb[0].mxu0
      %v1442 = vpop.f32.mrb[0].mxu0
      %v1443 = vpop.f32.mrb[0].mxu0
      %1444 = vdwg.mxu0
      %v1457 = vunpack.c.l.b16 %v1337
      %v1458 = vunpack.c.l.b16 %v1338
      %v1459 = vunpack.c.l.b16 %v1339
      %v1460 = vunpack.c.l.b16 %v1340
      %v1461 = vunpack.c.l.b16 %v1341
      %v1462 = vunpack.c.l.b16 %v1342
      %v1463 = vunpack.c.l.b16 %v1343
      %v1464 = vunpack.c.l.b16 %v1344
      %v1465 = vunpack.c.l.b16 %v1345
      %v1466 = vunpack.c.l.b16 %v1346
      %v1467 = vunpack.c.l.b16 %v1347
      %v1468 = vunpack.c.l.b16 %v1348
      %v1469 = vpack.c.b16 %v1458, %v1457
      %v1470 = vpack.c.b16 %v1460, %v1459
      %v1471 = vpack.c.b16 %v1462, %v1461
      %v1472 = vpack.c.b16 %v1464, %v1463
      %v1473 = vpack.c.b16 %v1466, %v1465
      %v1474 = vpack.c.b16 %v1468, %v1467
      %v1482 = vsel %vm764, %v1336, 0
      %1484 = vmatprep.subr.bf16.mxu0 0
      %1485 = vmatpush1.bf16.msra.mxu0 %v1469
      %1486 = vmatprep.subr.bf16.mxu0 0
      %1487 = vmatpush1.bf16.msra.mxu0 %v1470
      %1488 = vmatprep.subr.bf16.mxu0 0
      %1489 = vmatpush1.bf16.msra.mxu0 %v1471
      %1490 = vmatprep.subr.bf16.mxu0 0
      %1491 = vmatpush1.bf16.msra.mxu0 %v1472
      %1492 = vmatprep.subr.bf16.mxu0 0
      %1493 = vmatpush1.bf16.msra.mxu0 %v1473
      %1494 = vmatprep.subr.bf16.mxu0 0
      %1495 = vmatpush1.bf16.msra.mxu0 %v1474
      %1496 = vmatprep.subr.bf16.mxu0 0
      %1497 = vmatpush1.bf16.msra.mxu0 0
      %1498 = vmatprep.subr.bf16.mxu0 0
      %1499 = vmatpush1.bf16.msra.mxu0 0
      %1500 = vmatprep.subr.bf16.mxu0 0
      %1501 = vmatpush1.bf16.msra.mxu0 0
      %1502 = vmatprep.subr.bf16.mxu0 0
      %1503 = vmatpush1.bf16.msra.mxu0 0
      %1504 = vmatprep.subr.bf16.mxu0 0
      %1505 = vmatpush1.bf16.msra.mxu0 0
      %1506 = vmatprep.subr.bf16.mxu0 0
      %1507 = vmatpush1.bf16.msra.mxu0 0
      %1508 = vmatprep.subr.bf16.mxu0 0
      %1509 = vmatpush1.bf16.msra.mxu0 0
      %1510 = vmatprep.subr.bf16.mxu0 0
      %1511 = vmatpush1.bf16.msra.mxu0 0
      %1512 = vmatprep.subr.bf16.mxu0 0
      %1513 = vmatpush1.bf16.msra.mxu0 0
      %1514 = vmatprep.subr.bf16.mxu0 0
      %1515 = vmatpush1.bf16.msra.mxu0 0
      %1516 = vmatprep.mubr.bf16.mxu0 0
      %1517 = vmatmul.mubr.bf16.gmra.mrb[0].mxu0 %v1482
      %v1518 = vpop.f32.mrb[0].mxu0
      %v1519 = vadd.f32 %v1440, %v1518
      %v1520 = vpop.f32.mrb[0].mxu0
      %v1521 = vpop.f32.mrb[0].mxu0
      %v1522 = vpop.f32.mrb[0].mxu0
      %1523 = vdwg.mxu0
      %v1524 = vld [vmem:[%s887] sm:$0xf]
      %v1525 = vld [vmem:[%s887 + $0x4] sm:$0xf]
      %v1526 = vld [vmem:[%s887 + $0x8] sm:$0xf]
      %v1527 = vld [vmem:[%s887 + $0xc] sm:$0xf]
      %v1528 = vld [vmem:[%s887 + $0x10] sm:$0xf]
      %v1529 = vld [vmem:[%s887 + $0x14] sm:$0xf]
      %v1530 = vld [vmem:[%s887 + $0x18] sm:$0xf]
      %v1531 = vld [vmem:[%s887 + $0x1c] sm:$0xf]
      %v1532 = vld [vmem:[%s887 + $0x20] sm:$0xf]
      %v1533 = vld [vmem:[%s887 + $0x24] sm:$0xf]
      %v1534 = vld [vmem:[%s887 + $0x28] sm:$0xf]
      %v1535 = vld [vmem:[%s887 + $0x2c] sm:$0xf]
      %v1537 = vunpack.c.l.b16 %v1336
      %v1538 = vpack.c.b16 %v1537, %v1537
      %v1540 = vshrl.u32 %v1538, 16
      %v1542 = vshll.u32 %v1538, 16
      %v1544 = vrot.slane %v1542, 1
      %v1545 = vor.u32 %v1540, %v1544
      %v1558 = vunpack.c.l.b16 %v1524
      %v1559 = vunpack.c.l.b16 %v1525
      %v1560 = vunpack.c.l.b16 %v1526
      %v1561 = vunpack.c.l.b16 %v1527
      %v1562 = vunpack.c.l.b16 %v1528
      %v1563 = vunpack.c.l.b16 %v1529
      %v1564 = vunpack.c.l.b16 %v1530
      %v1565 = vunpack.c.l.b16 %v1531
      %v1566 = vunpack.c.l.b16 %v1532
      %v1567 = vunpack.c.l.b16 %v1533
      %v1568 = vunpack.c.l.b16 %v1534
      %v1569 = vunpack.c.l.b16 %v1535
      %v1570 = vpack.c.b16 %v1559, %v1558
      %v1571 = vpack.c.b16 %v1561, %v1560
      %v1572 = vpack.c.b16 %v1563, %v1562
      %v1573 = vpack.c.b16 %v1565, %v1564
      %v1574 = vpack.c.b16 %v1567, %v1566
      %v1575 = vpack.c.b16 %v1569, %v1568
      %v1583 = vsel %vm764, %v1545, 0
      %1585 = vmatprep.subr.bf16.mxu0 0
      %1586 = vmatpush1.bf16.msra.mxu0 %v1570
      %1587 = vmatprep.subr.bf16.mxu0 0
      %1588 = vmatpush1.bf16.msra.mxu0 %v1571
      %1589 = vmatprep.subr.bf16.mxu0 0
      %1590 = vmatpush1.bf16.msra.mxu0 %v1572
      %1591 = vmatprep.subr.bf16.mxu0 0
      %1592 = vmatpush1.bf16.msra.mxu0 %v1573
      %1593 = vmatprep.subr.bf16.mxu0 0
      %1594 = vmatpush1.bf16.msra.mxu0 %v1574
      %1595 = vmatprep.subr.bf16.mxu0 0
      %1596 = vmatpush1.bf16.msra.mxu0 %v1575
      %1597 = vmatprep.subr.bf16.mxu0 0
      %1598 = vmatpush1.bf16.msra.mxu0 0
      %1599 = vmatprep.subr.bf16.mxu0 0
      %1600 = vmatpush1.bf16.msra.mxu0 0
      %1601 = vmatprep.subr.bf16.mxu0 0
      %1602 = vmatpush1.bf16.msra.mxu0 0
      %1603 = vmatprep.subr.bf16.mxu0 0
      %1604 = vmatpush1.bf16.msra.mxu0 0
      %1605 = vmatprep.subr.bf16.mxu0 0
      %1606 = vmatpush1.bf16.msra.mxu0 0
      %1607 = vmatprep.subr.bf16.mxu0 0
      %1608 = vmatpush1.bf16.msra.mxu0 0
      %1609 = vmatprep.subr.bf16.mxu0 0
      %1610 = vmatpush1.bf16.msra.mxu0 0
      %1611 = vmatprep.subr.bf16.mxu0 0
      %1612 = vmatpush1.bf16.msra.mxu0 0
      %1613 = vmatprep.subr.bf16.mxu0 0
      %1614 = vmatpush1.bf16.msra.mxu0 0
      %1615 = vmatprep.subr.bf16.mxu0 0
      %1616 = vmatpush1.bf16.msra.mxu0 0
      %1617 = vmatprep.mubr.bf16.mxu0 0
      %1618 = vmatmul.mubr.bf16.gmra.mrb[0].mxu0 %v1583
      %v1619 = vpop.f32.mrb[0].mxu0
      %v1620 = vadd.f32 0.0, %v1619
      %v1621 = vpop.f32.mrb[0].mxu0
      %v1622 = vpop.f32.mrb[0].mxu0
      %v1623 = vpop.f32.mrb[0].mxu0
      %1624 = vdwg.mxu0
      %v1625 = vadd.f32 %v1519, %v1620
      %v1626 = vadd.f32 %v1625, %v695
      %v1627 = vmax.f32 %v1626, 0.0
      %v1628 = vpack.c.bf16 %v1627, %v1627
      %v1631 = vunpack.c.l.s4 1983009808
      %v1632 = vunpack.c.0.s8 %v1631
      %v1633 = vlaneseq
      %v1634 = vshrl.u32 %v1633, 7
      %v1635 = vsub.s32 %v1632, %v1634
      %v1636 = vrot.slane %v1628, %v1635
      %1637 = vrot.lane.b32.xlu0 %v1636, 64
      %v1638 = vpop.permute.xlu0 %1637
      %vm1640 = vcmask 779776
      %vm1641 = vmand %vm1640, %vm994
      %v1642 = vld [vmem:[#allocation3] sm:$0x3]
      %v1643 = vsel %vm1641, %v1638, %v1642
      %1644 = vst [vmem:[#allocation3] sm:$0x3] %v1643
      %v1645 = vld [vmem:[#allocation3] sm:$0x3]
      %v1646 = vld [vmem:[%s5] sm:$0xf]
      %v1647 = vld [vmem:[%s5 + $0x4] sm:$0xf]
      %v1648 = vld [vmem:[%s5 + $0x8] sm:$0xf]
      %v1649 = vld [vmem:[%s5 + $0xc] sm:$0xf]
      %v1650 = vld [vmem:[%s5 + $0x10] sm:$0xf]
      %v1651 = vld [vmem:[%s5 + $0x14] sm:$0xf]
      %v1652 = vld [vmem:[%s5 + $0x18] sm:$0xf]
      %v1653 = vld [vmem:[%s5 + $0x1c] sm:$0xf]
      %v1654 = vld [vmem:[%s5 + $0x20] sm:$0xf]
      %v1655 = vld [vmem:[%s5 + $0x24] sm:$0xf]
      %v1656 = vld [vmem:[%s5 + $0x28] sm:$0xf]
      %v1657 = vld [vmem:[%s5 + $0x2c] sm:$0xf]
      %v1658 = vld [vmem:[%s6] sm:$0x1]
      %v1660 = vlaneseq
      %v1661 = vshrl.u32 %v1660, 7
      %v1662 = vsub.s32 0, %v1661
      %v1663 = vrot.slane %v1658, %v1662
      %v1677 = vunpack.c.l.b16 %v1646
      %v1678 = vunpack.c.l.b16 %v1647
      %v1679 = vunpack.c.l.b16 %v1648
      %v1680 = vunpack.c.l.b16 %v1649
      %v1681 = vunpack.c.l.b16 %v1650
      %v1682 = vunpack.c.l.b16 %v1651
      %v1683 = vunpack.c.l.b16 %v1652
      %v1684 = vunpack.c.l.b16 %v1653
      %v1685 = vunpack.c.l.b16 %v1654
      %v1686 = vunpack.c.l.b16 %v1655
      %v1687 = vunpack.c.l.b16 %v1656
      %v1688 = vunpack.c.l.b16 %v1657
      %v1689 = vpack.c.b16 %v1678, %v1677
      %v1690 = vpack.c.b16 %v1680, %v1679
      %v1691 = vpack.c.b16 %v1682, %v1681
      %v1692 = vpack.c.b16 %v1684, %v1683
      %v1693 = vpack.c.b16 %v1686, %v1685
      %v1694 = vpack.c.b16 %v1688, %v1687
      %v1702 = vsel %vm764, %v1645, 0
      %1704 = vmatprep.subr.bf16.mxu0 0
      %1705 = vmatpush1.bf16.msra.mxu0 %v1689
      %1706 = vmatprep.subr.bf16.mxu0 0
      %1707 = vmatpush1.bf16.msra.mxu0 %v1690
      %1708 = vmatprep.subr.bf16.mxu0 0
      %1709 = vmatpush1.bf16.msra.mxu0 %v1691
      %1710 = vmatprep.subr.bf16.mxu0 0
      %1711 = vmatpush1.bf16.msra.mxu0 %v1692
      %1712 = vmatprep.subr.bf16.mxu0 0
      %1713 = vmatpush1.bf16.msra.mxu0 %v1693
      %1714 = vmatprep.subr.bf16.mxu0 0
      %1715 = vmatpush1.bf16.msra.mxu0 %v1694
      %1716 = vmatprep.subr.bf16.mxu0 0
      %1717 = vmatpush1.bf16.msra.mxu0 0
      %1718 = vmatprep.subr.bf16.mxu0 0
      %1719 = vmatpush1.bf16.msra.mxu0 0
      %1720 = vmatprep.subr.bf16.mxu0 0
      %1721 = vmatpush1.bf16.msra.mxu0 0
      %1722 = vmatprep.subr.bf16.mxu0 0
      %1723 = vmatpush1.bf16.msra.mxu0 0
      %1724 = vmatprep.subr.bf16.mxu0 0
      %1725 = vmatpush1.bf16.msra.mxu0 0
      %1726 = vmatprep.subr.bf16.mxu0 0
      %1727 = vmatpush1.bf16.msra.mxu0 0
      %1728 = vmatprep.subr.bf16.mxu0 0
      %1729 = vmatpush1.bf16.msra.mxu0 0
      %1730 = vmatprep.subr.bf16.mxu0 0
      %1731 = vmatpush1.bf16.msra.mxu0 0
      %1732 = vmatprep.subr.bf16.mxu0 0
      %1733 = vmatpush1.bf16.msra.mxu0 0
      %1734 = vmatprep.subr.bf16.mxu0 0
      %1735 = vmatpush1.bf16.msra.mxu0 0
      %1736 = vmatprep.mubr.bf16.mxu0 0
      %1737 = vmatmul.mubr.bf16.gmra.mrb[0].mxu0 %v1702
      %v1738 = vpop.f32.mrb[0].mxu0
      %v1739 = vadd.f32 %v1663, %v1738
      %v1740 = vpop.f32.mrb[0].mxu0
      %v1741 = vpop.f32.mrb[0].mxu0
      %v1742 = vpop.f32.mrb[0].mxu0
      %1743 = vdwg.mxu0
      %vm1744 = vcmask 256000
      %1745 = vst.msk [vmem:[%s273] sm:$0x7] %vm1744, %v1739
      %p1746 = scmp.lt.s32.totalorder %s18, 1
      %s1747 = scalar_select %p1746, %s18, 1
      %s1748 = smul.addr %s1747, 4
      %s1749 = scalar_lea.vmem %s7, %s1748
      // Predicated region
      $region49: #{conv2d_subsampling4_forward.1} parent=47 // pred_check
        %p1750 = pneg %p188
      $region50: #{conv2d_subsampling4_forward.1} parent=47 // pred_check_branch
        %1752 = sbr.rel (%p1750) target = $region52
      $region51: #{conv2d_subsampling4_forward.1} parent=47 // pred_region
        _
      $region52: #{conv2d_subsampling4_forward.1} parent=47 // pred_fallthru
        _
    $region48: #{conv2d_subsampling4_forward.1} parent=5 // pred_fallthru
      _
    %p1753 = scmp.le.s32.totalorder 2, %s13
    // Predicated region
    $region53: #{conv2d_subsampling4_forward.1} parent=5 // pred_check
      %p1754 = pneg %p1753
    $region54: #{conv2d_subsampling4_forward.1} parent=5 // pred_check_branch
      %1756 = sbr.rel (%p1754) target = $region56
    $region55: #{conv2d_subsampling4_forward.1} parent=5 // pred_region
      %s1757 = ssub.s32 %s13, 2
      // Predicated region
      $region57: #{conv2d_subsampling4_forward.1} parent=55 // pred_check
        %p1758 = pneg %p194
      $region58: #{conv2d_subsampling4_forward.1} parent=55 // pred_check_branch
        %1760 = sbr.rel (%p1758) target = $region60
      $region59: #{conv2d_subsampling4_forward.1} parent=55 // pred_region
        %p1761 = scmp.lt.s32.totalorder %s19, 1
        %s1762 = scalar_select %p1761, %s19, 1
        %s1763 = smul.addr %s1762, 4
        %s1764 = scalar_lea.vmem %s7, %s1763
      $region60: #{conv2d_subsampling4_forward.1} parent=55 // pred_fallthru
        _
    $region56: #{conv2d_subsampling4_forward.1} parent=5 // pred_fallthru
      _
  $region6: #{conv2d_subsampling4_forward.1} parent=0 // loop_footer
    %s17 = sadd.s32 1, %s13
  $region7: #{conv2d_subsampling4_forward.1} parent=0 // loop_footer_branch
    %12 = sbr.rel target = $region3
  $region8: #{conv2d_subsampling4_forward.1} parent=0 // loop_exit
    _

</llo_original>
